<compile_context>
chip_gen: v7x
topology: tpu7x:2x2x1
jax: 0.10.0
libtpu: 0.0.40
codegen_flags: <defaults>
</compile_context>

<pallas_src>
import jax
import jax.numpy as jnp
from jax.experimental import pallas as pl
from jax.experimental.pallas import tpu as pltpu

D_GRID = 100      # grid_prob features
D_SEARCH = 100    # search_info features
D_IN = 201        # 100 + 100 + 1 (logical)
D_HID = 150       # logical hidden
D_OUT = 100       # logical output

H_PAD = 256       # padded hidden (MXU/lane aligned)
O_PAD = 128       # padded output (lane-dense stores)


def _cdiv(a, b):
    return -(-a // b)


def _round_up(x, m):
    return ((x + m - 1) // m) * m


def _pick_tb(B, tb):
    """Pick the batch tile: multiple of 8, <= rounded-up B, and (by default) large
    enough to amortize per-step overhead while still giving >= 2 grid steps for
    megacore (v7x) when B is big enough to split."""
    if tb is None:
        if B >= 16:
            tb = min(2048, _round_up(_cdiv(B, 2), 8))
        else:
            tb = _round_up(max(B, 1), 8)
    tb = min(int(tb), _round_up(B, 8))
    return max(_round_up(tb, 8), 8)


def _mlp_kernel(gp_ref, si_ref, ql_ref,
                w1a_ref, w1b_ref, w1c_ref, b1_ref,
                w2_ref, b2_ref, o_ref):
    # gp_ref: (TB, 100)   si_ref: (TB, 100)   ql_ref: (TB, 1)
    # w1a/w1b: (100, 256) w1c: (1, 256)       b1: (1, 256)
    # w2: (256, 128)      b2: (1, 128)        o_ref: (TB, 128)
    hp = jax.lax.Precision.HIGHEST  # exact f32 parity; kernel is not MXU-bound
    h = jnp.dot(gp_ref[...], w1a_ref[...],
                preferred_element_type=jnp.float32, precision=hp)
    h = h + jnp.dot(si_ref[...], w1b_ref[...],
                    preferred_element_type=jnp.float32, precision=hp)
    h = h + ql_ref[...] * w1c_ref[...]          # (TB,1)*(1,256) broadcast (VPU)
    h = h + b1_ref[...]
    h = jnp.maximum(h, 0.0)                     # ReLU; padded hidden cols stay exactly 0
    out = jnp.dot(h, w2_ref[...],
                  preferred_element_type=jnp.float32, precision=hp) + b2_ref[...]
    o_ref[...] = out.astype(o_ref.dtype)


def model_search_forward(search_info, query_left, grid_prob, packed, *,
                         tb=None, slice_output=True):
    """Pallas equivalent of Model_search.forward.

    search_info: (B, 100) f32
    query_left:  (B,)     f32
    grid_prob:   (B, 100) f32
    packed:      dict from pack_params()
    returns:     (B, 100) f32 if slice_output else (B, 128) f32 (cols >= 100 are junk
                 of the zero-padded weights == exactly b2 pad == 0; consumers that can
                 ignore them should pass slice_output=False to skip the column slice).
    """
    B = grid_prob.shape[0]
    tb = _pick_tb(B, tb)
    n_steps = _cdiv(B, tb)

    ql2 = query_left[:, None]  # (B, 1)

    w1a, w1b, w1c = packed["w1a"], packed["w1b"], packed["w1c"]
    b1, w2, b2 = packed["b1"], packed["w2"], packed["b2"]

    weight_elems = (w1a.size + w1b.size + w1c.size + b1.size + w2.size + b2.size)
    cost = pl.CostEstimate(
        flops=2 * B * (D_GRID * H_PAD + D_SEARCH * H_PAD + H_PAD * O_PAD),
        transcendentals=0,
        bytes_accessed=4 * (B * (D_GRID + D_SEARCH + 1 + O_PAD) + weight_elems),
    )

    out = pl.pallas_call(
        _mlp_kernel,
        out_shape=jax.ShapeDtypeStruct((B, O_PAD), jnp.float32),
        grid_spec=pltpu.PrefetchScalarGridSpec(
            num_scalar_prefetch=0,
            grid=(n_steps,),
            in_specs=[
                pl.BlockSpec((tb, D_GRID), lambda i: (i, 0)),      # grid_prob tile
                pl.BlockSpec((tb, D_SEARCH), lambda i: (i, 0)),    # search_info tile
                pl.BlockSpec((tb, 1), lambda i: (i, 0)),           # query_left tile
                pl.BlockSpec((D_GRID, H_PAD), lambda i: (0, 0)),   # W1a (resident)
                pl.BlockSpec((D_SEARCH, H_PAD), lambda i: (0, 0)), # W1b (resident)
                pl.BlockSpec((1, H_PAD), lambda i: (0, 0)),        # w1c (resident)
                pl.BlockSpec((1, H_PAD), lambda i: (0, 0)),        # b1  (resident)
                pl.BlockSpec((H_PAD, O_PAD), lambda i: (0, 0)),    # W2  (resident)
                pl.BlockSpec((1, O_PAD), lambda i: (0, 0)),        # b2  (resident)
            ],
            out_specs=pl.BlockSpec((tb, O_PAD), lambda i: (i, 0)),
        ),
        compiler_params=pltpu.CompilerParams(
            dimension_semantics=("parallel",),  # batch tiles shard across TCs on v7x
        ),
        cost_estimate=cost,
    )(grid_prob, search_info, ql2, w1a, w1b, w1c, b1, w2, b2)

    if slice_output:
        return out[:, :D_OUT]
    return out


def init_params(key):
    """Raw (unpadded) params, mimicking nn.Linear's uniform(-1/sqrt(fan_in), ...).

    Weights are stored as (in, out) so the math is x @ W + b (PyTorch does x @ W.T
    with W stored (out, in) — same numbers, transposed once here).
    """
    k1, k2, k3, k4 = jax.random.split(key, 4)
    lim1 = 1.0 / jnp.sqrt(jnp.float32(D_IN))
    lim2 = 1.0 / jnp.sqrt(jnp.float32(D_HID))
    w1 = jax.random.uniform(k1, (D_IN, D_HID), jnp.float32, -lim1, lim1)
    b1 = jax.random.uniform(k2, (D_HID,), jnp.float32, -lim1, lim1)
    w2 = jax.random.uniform(k3, (D_HID, D_OUT), jnp.float32, -lim2, lim2)
    b2 = jax.random.uniform(k4, (D_OUT,), jnp.float32, -lim2, lim2)
    return {"w1": w1, "b1": b1, "w2": w2, "b2": b2}


def pack_params(raw):
    """Split W1 by concat segment and zero-pad to lane/MXU-aligned shapes.

    Hidden 150 -> 256, output 100 -> 128.  Zero padding keeps the math exact:
    padded hidden columns get bias 0 -> ReLU(0) = 0 -> contribute nothing to the
    second dot; padded output columns are exactly 0 and ignored by the column slice.
    """
    w1, b1, w2, b2 = raw["w1"], raw["b1"], raw["w2"], raw["b2"]

    # Concat order in forward(): [grid_prob (100), search_info (100), query_left (1)].
    w1a = w1[:D_GRID, :]                         # (100, 150)
    w1b = w1[D_GRID:D_GRID + D_SEARCH, :]        # (100, 150)
    w1c = w1[D_GRID + D_SEARCH:, :]              # (1, 150)

    def pad_cols(x, n):
        return jnp.pad(x, ((0, 0), (0, n - x.shape[1])))

    w1a_p = pad_cols(w1a, H_PAD)                                  # (100, 256)
    w1b_p = pad_cols(w1b, H_PAD)                                  # (100, 256)
    w1c_p = pad_cols(w1c, H_PAD)                                  # (1, 256)
    b1_p = pad_cols(b1[None, :], H_PAD)                           # (1, 256)
    w2_p = jnp.pad(w2, ((0, H_PAD - D_HID), (0, O_PAD - D_OUT)))  # (256, 128)
    b2_p = pad_cols(b2[None, :], O_PAD)                           # (1, 128)

    return {"w1a": w1a_p, "w1b": w1b_p, "w1c": w1c_p,
            "b1": b1_p, "w2": w2_p, "b2": b2_p}


def _reference(search_info, query_left, grid_prob, raw):
    combined = jnp.concatenate([grid_prob, search_info, query_left[:, None]], axis=1)
    h = jnp.maximum(combined @ raw["w1"] + raw["b1"], 0.0)
    return h @ raw["w2"] + raw["b2"]


if __name__ == "__main__":
    key = jax.random.PRNGKey(0)
    kp, ks, kq, kg = jax.random.split(key, 4)

    raw = init_params(kp)
    packed = pack_params(raw)

    # Small test (B=8): single grid step.
    B = 8
    search_info = jax.random.normal(ks, (B, D_SEARCH), jnp.float32)
    query_left = jax.random.normal(kq, (B,), jnp.float32)
    grid_prob = jax.random.normal(kg, (B, D_GRID), jnp.float32)

    out = model_search_forward(search_info, query_left, grid_prob, packed)
    out = jax.block_until_ready(out)
    ref = _reference(search_info, query_left, grid_prob, raw)
    assert out.shape == (B, D_OUT)
    assert jnp.allclose(out, ref, atol=1e-4, rtol=1e-4)

    # Multi-step test (B=300, tb=128): exercises pipelining + ragged last block
    # (no wrapper-side padding; last block has 44 valid rows).
    B2 = 300
    ks2, kq2, kg2 = jax.random.split(jax.random.PRNGKey(1), 3)
    si2 = jax.random.normal(ks2, (B2, D_SEARCH), jnp.float32)
    ql2 = jax.random.normal(kq2, (B2,), jnp.float32)
    gp2 = jax.random.normal(kg2, (B2, D_GRID), jnp.float32)

    out2 = model_search_forward(si2, ql2, gp2, packed, tb=128)
    out2 = jax.block_until_ready(out2)
    ref2 = _reference(si2, ql2, gp2, raw)
    assert out2.shape == (B2, D_OUT)
    assert jnp.allclose(out2, ref2, atol=1e-4, rtol=1e-4)

    # Default-tb path (auto-picks >=2 steps for megacore), lane-padded output variant.
    out3 = model_search_forward(si2, ql2, gp2, packed, slice_output=False)
    out3 = jax.block_until_ready(out3)
    assert out3.shape == (B2, O_PAD)
    assert jnp.allclose(out3[:, :D_OUT], ref2, atol=1e-4, rtol=1e-4)

    print("KERNEL_OK")
</pallas_src>

<mosaic_0001>
module attributes {stable_mosaic.version = 11 : i64} {
  func.func @_mlp_kernel(%arg0: i32, %arg1: memref<8x100xf32, #tpu.memory_space<vmem>>, %arg2: memref<8x100xf32, #tpu.memory_space<vmem>>, %arg3: memref<8x1xf32, #tpu.memory_space<vmem>>, %arg4: memref<100x256xf32, #tpu.memory_space<vmem>>, %arg5: memref<100x256xf32, #tpu.memory_space<vmem>>, %arg6: memref<1x256xf32, #tpu.memory_space<vmem>>, %arg7: memref<1x256xf32, #tpu.memory_space<vmem>>, %arg8: memref<256x128xf32, #tpu.memory_space<vmem>>, %arg9: memref<1x128xf32, #tpu.memory_space<vmem>>, %arg10: memref<8x128xf32, #tpu.memory_space<vmem>>) attributes {dimension_semantics = [#tpu.dimension_semantics<parallel>], iteration_bounds = array<i64: 1>, scalar_prefetch = 0 : i64, scratch_operands = 0 : i64, tpu.core_type = #tpu.core_type<tc>, window_params = [{transform_indices = @transform_0, window_bounds = array<i64: 8, 100>}, {transform_indices = @transform_1, window_bounds = array<i64: 8, 100>}, {transform_indices = @transform_2, window_bounds = array<i64: 8, 1>}, {pipeline_mode = #tpu.pipeline_mode<synchronous>, transform_indices = @transform_3, window_bounds = array<i64: 100, 256>}, {pipeline_mode = #tpu.pipeline_mode<synchronous>, transform_indices = @transform_4, window_bounds = array<i64: 100, 256>}, {pipeline_mode = #tpu.pipeline_mode<synchronous>, transform_indices = @transform_5, window_bounds = array<i64: 1, 256>}, {pipeline_mode = #tpu.pipeline_mode<synchronous>, transform_indices = @transform_6, window_bounds = array<i64: 1, 256>}, {pipeline_mode = #tpu.pipeline_mode<synchronous>, transform_indices = @transform_7, window_bounds = array<i64: 256, 128>}, {pipeline_mode = #tpu.pipeline_mode<synchronous>, transform_indices = @transform_8, window_bounds = array<i64: 1, 128>}, {transform_indices = @transform_9, window_bounds = array<i64: 8, 128>}]} {
    %c0 = arith.constant 0 : index
    %c0_0 = arith.constant 0 : index
    %0 = vector.load %arg1[%c0, %c0_0] : memref<8x100xf32, #tpu.memory_space<vmem>>, vector<8x100xf32>
    %c0_1 = arith.constant 0 : index
    %c0_2 = arith.constant 0 : index
    %1 = vector.load %arg4[%c0_1, %c0_2] : memref<100x256xf32, #tpu.memory_space<vmem>>, vector<100x256xf32>
    %cst = arith.constant dense<0.000000e+00> : vector<8x256xf32>
    %2 = tpu.matmul %0, %1, %cst {dimension_numbers = #tpu.dot_dimension_numbers<[1], [0], [0], [1], [0, 0, 1, 1], [], []>, precision = #tpu.contract_precision<fp32>} : vector<8x100xf32>, vector<100x256xf32>, vector<8x256xf32> -> vector<8x256xf32>
    %c0_3 = arith.constant 0 : index
    %c0_4 = arith.constant 0 : index
    %3 = vector.load %arg2[%c0_3, %c0_4] : memref<8x100xf32, #tpu.memory_space<vmem>>, vector<8x100xf32>
    %c0_5 = arith.constant 0 : index
    %c0_6 = arith.constant 0 : index
    %4 = vector.load %arg5[%c0_5, %c0_6] : memref<100x256xf32, #tpu.memory_space<vmem>>, vector<100x256xf32>
    %cst_7 = arith.constant dense<0.000000e+00> : vector<8x256xf32>
    %5 = tpu.matmul %3, %4, %cst_7 {dimension_numbers = #tpu.dot_dimension_numbers<[1], [0], [0], [1], [0, 0, 1, 1], [], []>, precision = #tpu.contract_precision<fp32>} : vector<8x100xf32>, vector<100x256xf32>, vector<8x256xf32> -> vector<8x256xf32>
    %6 = arith.addf %2, %5 : vector<8x256xf32>
    %c0_8 = arith.constant 0 : index
    %c0_9 = arith.constant 0 : index
    %7 = vector.load %arg3[%c0_8, %c0_9] : memref<8x1xf32, #tpu.memory_space<vmem>>, vector<8x1xf32>
    %c0_10 = arith.constant 0 : index
    %c0_11 = arith.constant 0 : index
    %8 = vector.load %arg6[%c0_10, %c0_11] : memref<1x256xf32, #tpu.memory_space<vmem>>, vector<1x256xf32>
    %9 = vector.broadcast %7 : vector<8x1xf32> to vector<8x256xf32>
    %10 = vector.broadcast %8 : vector<1x256xf32> to vector<8x256xf32>
    %11 = arith.mulf %9, %10 : vector<8x256xf32>
    %12 = arith.addf %6, %11 : vector<8x256xf32>
    %c0_12 = arith.constant 0 : index
    %c0_13 = arith.constant 0 : index
    %13 = vector.load %arg7[%c0_12, %c0_13] : memref<1x256xf32, #tpu.memory_space<vmem>>, vector<1x256xf32>
    %14 = vector.broadcast %13 : vector<1x256xf32> to vector<8x256xf32>
    %15 = arith.addf %12, %14 : vector<8x256xf32>
    %cst_14 = arith.constant 0.000000e+00 : f32
    %16 = vector.broadcast %cst_14 : f32 to vector<8x256xf32>
    %17 = arith.maximumf %15, %16 : vector<8x256xf32>
    %c0_15 = arith.constant 0 : index
    %c0_16 = arith.constant 0 : index
    %18 = vector.load %arg8[%c0_15, %c0_16] : memref<256x128xf32, #tpu.memory_space<vmem>>, vector<256x128xf32>
    %cst_17 = arith.constant dense<0.000000e+00> : vector<8x128xf32>
    %19 = tpu.matmul %17, %18, %cst_17 {dimension_numbers = #tpu.dot_dimension_numbers<[1], [0], [0], [1], [0, 0, 1, 1], [], []>, precision = #tpu.contract_precision<fp32>} : vector<8x256xf32>, vector<256x128xf32>, vector<8x128xf32> -> vector<8x128xf32>
    %c0_18 = arith.constant 0 : index
    %c0_19 = arith.constant 0 : index
    %20 = vector.load %arg9[%c0_18, %c0_19] : memref<1x128xf32, #tpu.memory_space<vmem>>, vector<1x128xf32>
    %21 = vector.broadcast %20 : vector<1x128xf32> to vector<8x128xf32>
    %22 = arith.addf %19, %21 : vector<8x128xf32>
    %c0_20 = arith.constant 0 : index
    %c0_21 = arith.constant 0 : index
    %23 = vector.load %arg10[%c0_20, %c0_21] : memref<8x128xf32, #tpu.memory_space<vmem>>, vector<8x128xf32>
    tpu.vector_store %arg10[%c0_20, %c0_21], %22 {strides = array<i32>} : memref<8x128xf32, #tpu.memory_space<vmem>>, vector<8x128xf32>,
    return
  }
  func.func @transform_0(%arg0: i32) -> (i32, i32) {
    %c0_i32 = arith.constant 0 : i32
    %c0_i32_0 = arith.constant 0 : i32
    return %arg0, %c0_i32 : i32, i32
  }
  func.func @transform_1(%arg0: i32) -> (i32, i32) {
    %c0_i32 = arith.constant 0 : i32
    %c0_i32_0 = arith.constant 0 : i32
    return %arg0, %c0_i32 : i32, i32
  }
  func.func @transform_2(%arg0: i32) -> (i32, i32) {
    %c0_i32 = arith.constant 0 : i32
    %c0_i32_0 = arith.constant 0 : i32
    return %arg0, %c0_i32 : i32, i32
  }
  func.func @transform_3(%arg0: i32) -> (i32, i32) {
    %c0_i32 = arith.constant 0 : i32
    %c0_i32_0 = arith.constant 0 : i32
    %c0_i32_1 = arith.constant 0 : i32
    return %c0_i32, %c0_i32_0 : i32, i32
  }
  func.func @transform_4(%arg0: i32) -> (i32, i32) {
    %c0_i32 = arith.constant 0 : i32
    %c0_i32_0 = arith.constant 0 : i32
    %c0_i32_1 = arith.constant 0 : i32
    return %c0_i32, %c0_i32_0 : i32, i32
  }
  func.func @transform_5(%arg0: i32) -> (i32, i32) {
    %c0_i32 = arith.constant 0 : i32
    %c0_i32_0 = arith.constant 0 : i32
    %c0_i32_1 = arith.constant 0 : i32
    return %c0_i32, %c0_i32_0 : i32, i32
  }
  func.func @transform_6(%arg0: i32) -> (i32, i32) {
    %c0_i32 = arith.constant 0 : i32
    %c0_i32_0 = arith.constant 0 : i32
    %c0_i32_1 = arith.constant 0 : i32
    return %c0_i32, %c0_i32_0 : i32, i32
  }
  func.func @transform_7(%arg0: i32) -> (i32, i32) {
    %c0_i32 = arith.constant 0 : i32
    %c0_i32_0 = arith.constant 0 : i32
    %c0_i32_1 = arith.constant 0 : i32
    return %c0_i32, %c0_i32_0 : i32, i32
  }
  func.func @transform_8(%arg0: i32) -> (i32, i32) {
    %c0_i32 = arith.constant 0 : i32
    %c0_i32_0 = arith.constant 0 : i32
    %c0_i32_1 = arith.constant 0 : i32
    return %c0_i32, %c0_i32_0 : i32, i32
  }
  func.func @transform_9(%arg0: i32) -> (i32, i32) {
    %c0_i32 = arith.constant 0 : i32
    %c0_i32_0 = arith.constant 0 : i32
    return %arg0, %c0_i32 : i32, i32
  }
}

</mosaic_0001>

<llo_original>
// kernel: tpu_custom_call.1
$region0: #{tpu_custom_call.1}
  #allocation0 [shape = 'u32[]', space=smem, size = 0x4, offset = 0x4, fixed_abs, tag = 'smem constant byte address 0x4 - core index']
  #allocation1 [shape = 'u32[144,128]{1,0:T(1,128)}', space=vmem, size = 0x12000, scoped, tag = 'internal scratch']
  %s0 = inlined_call_operand.vmem [shape: f32[8,100], index: 0, kind: input, shape index: {}]
  %s1 = inlined_call_operand.hbm [shape: f32[8,100], index: 1, kind: input, shape index: {}]
  %s2 = inlined_call_operand.vmem [shape: f32[8,1], index: 2, kind: input, shape index: {}]
  %s3 = inlined_call_operand.hbm [shape: f32[100,256], index: 3, kind: input, shape index: {}]
  %s4 = inlined_call_operand.hbm [shape: f32[100,256], index: 4, kind: input, shape index: {}]
  %s5 = inlined_call_operand.vmem [shape: f32[1,256], index: 5, kind: input, shape index: {}]
  %s6 = inlined_call_operand.vmem [shape: f32[1,256], index: 6, kind: input, shape index: {}]
  %s7 = inlined_call_operand.hbm [shape: f32[256,128], index: 7, kind: input, shape index: {}]
  %s8 = inlined_call_operand.vmem [shape: f32[1,128], index: 8, kind: input, shape index: {}]
  %s9 = inlined_call_operand.hbm [shape: f32[8,128], index: 9, kind: output, shape index: {}]
  %s10 = sld [smem:[#allocation0]]
  $region62: #{tpu_custom_call.1} parent=0
    _
  %s12 = ssub.s32 1, %s10
  %s13 = scalar_select 0, %s12, %s10
  $region1: #{tpu_custom_call.1} parent=0
    #allocation2 [shape = 'u8[4096]{0}', space=vmem, size = 0x1000, scoped, tag = 'input window, operand 1, single buffered']
    #allocation3 [shape = 's32[1]{0}', space=sflag, size = 0x4, scoped, tag = 'scoped memory for tpu_custom_call.1']
    #allocation4 [shape = 's32[1]{0}', space=sflag, size = 0x4, scoped, tag = 'scoped memory for tpu_custom_call.1']
    #allocation5 [shape = 'u8[106496]{0}', space=vmem, size = 0x1a000, scoped, tag = 'input window, operand 3, single buffered']
    #allocation6 [shape = 's32[1]{0}', space=sflag, size = 0x4, scoped, tag = 'scoped memory for tpu_custom_call.1']
    #allocation7 [shape = 'u8[106496]{0}', space=vmem, size = 0x1a000, scoped, tag = 'input window, operand 4, single buffered']
    #allocation8 [shape = 'u8[131072]{0}', space=vmem, size = 0x20000, scoped, tag = 'input window, operand 7, single buffered']
    #allocation9 [shape = 's32[1]{0}', space=sflag, size = 0x4, scoped, tag = 'scoped memory for tpu_custom_call.1']
    #allocation10 [shape = 'u8[4096]{0}', space=vmem, size = 0x1000, scoped, tag = 'output window, operand 0, single buffered']
    %14 = vsyncpa [#allocation3], 0
    %15 = vsyncpa [#allocation6], 0
    %16 = vsyncpa [#allocation9], 0
    %17 = vsyncpa [#allocation4], 0
    // Predicated region
    $region2: #{tpu_custom_call.1} parent=1 // pred_check
      _
    $region3: #{tpu_custom_call.1} parent=1 // pred_check_branch
      %19 = sbr.rel (0) target = $region5
    $region4: #{tpu_custom_call.1} parent=1 // pred_region
      _
    $region5: #{tpu_custom_call.1} parent=1 // pred_fallthru
      _
    // Predicated region
    $region6: #{tpu_custom_call.1} parent=1 // pred_check
      _
    $region7: #{tpu_custom_call.1} parent=1 // pred_check_branch
      %21 = sbr.rel (0) target = $region9
    $region8: #{tpu_custom_call.1} parent=1 // pred_region
      %s23 = ssub.s32 128, 128
      %24 = vsyncadd [#allocation3], %s23
      %s26 = sshll.u32 [#allocation2], 4
      %s27 = int_to_ptr.vmem [resolvable:$true] %s26
      %29 = dma.hbm_to_vmem [thread:$0]  %s1, 128, %s27, [#allocation3]
    $region9: #{tpu_custom_call.1} parent=1 // pred_fallthru
      _
    // Predicated region
    $region10: #{tpu_custom_call.1} parent=1 // pred_check
      _
    $region11: #{tpu_custom_call.1} parent=1 // pred_check_branch
      %31 = sbr.rel (0) target = $region13
    $region12: #{tpu_custom_call.1} parent=1 // pred_region
      _
    $region13: #{tpu_custom_call.1} parent=1 // pred_fallthru
      _
    // Predicated region
    $region14: #{tpu_custom_call.1} parent=1 // pred_check
      _
    $region15: #{tpu_custom_call.1} parent=1 // pred_check_branch
      %33 = sbr.rel (0) target = $region17
    $region16: #{tpu_custom_call.1} parent=1 // pred_region
      %s35 = ssub.s32 3328, 3328
      %36 = vsyncadd [#allocation6], %s35
      %s37 = sshll.u32 [#allocation5], 4
      %s38 = int_to_ptr.vmem [resolvable:$true] %s37
      %43 = dma.hbm_to_vmem [thread:$0]  %s3, 3328, %s38, [#allocation6], 256, 256, 16
    $region17: #{tpu_custom_call.1} parent=1 // pred_fallthru
      _
    // Predicated region
    $region18: #{tpu_custom_call.1} parent=1 // pred_check
      _
    $region19: #{tpu_custom_call.1} parent=1 // pred_check_branch
      %45 = sbr.rel (0) target = $region21
    $region20: #{tpu_custom_call.1} parent=1 // pred_region
      %s47 = ssub.s32 3328, 3328
      %48 = vsyncadd [#allocation6], %s47
      %s49 = sshll.u32 [#allocation7], 4
      %s50 = int_to_ptr.vmem [resolvable:$true] %s49
      %55 = dma.hbm_to_vmem [thread:$0]  %s4, 3328, %s50, [#allocation6], 256, 256, 16
    $region21: #{tpu_custom_call.1} parent=1 // pred_fallthru
      _
    // Predicated region
    $region22: #{tpu_custom_call.1} parent=1 // pred_check
      _
    $region23: #{tpu_custom_call.1} parent=1 // pred_check_branch
      %57 = sbr.rel (0) target = $region25
    $region24: #{tpu_custom_call.1} parent=1 // pred_region
      _
    $region25: #{tpu_custom_call.1} parent=1 // pred_fallthru
      _
    // Predicated region
    $region26: #{tpu_custom_call.1} parent=1 // pred_check
      _
    $region27: #{tpu_custom_call.1} parent=1 // pred_check_branch
      %59 = sbr.rel (0) target = $region29
    $region28: #{tpu_custom_call.1} parent=1 // pred_region
      _
    $region29: #{tpu_custom_call.1} parent=1 // pred_fallthru
      _
    // Predicated region
    $region30: #{tpu_custom_call.1} parent=1 // pred_check
      _
    $region31: #{tpu_custom_call.1} parent=1 // pred_check_branch
      %61 = sbr.rel (0) target = $region33
    $region32: #{tpu_custom_call.1} parent=1 // pred_region
      %s63 = ssub.s32 4096, 4096
      %64 = vsyncadd [#allocation9], %s63
      %s65 = sshll.u32 [#allocation8], 4
      %s66 = int_to_ptr.vmem [resolvable:$true] %s65
      %71 = dma.hbm_to_vmem [thread:$0]  %s7, 4096, %s66, [#allocation9], 128, 128, 8
    $region33: #{tpu_custom_call.1} parent=1 // pred_fallthru
      _
    // Predicated region
    $region34: #{tpu_custom_call.1} parent=1 // pred_check
      _
    $region35: #{tpu_custom_call.1} parent=1 // pred_check_branch
      %73 = sbr.rel (0) target = $region37
    $region36: #{tpu_custom_call.1} parent=1 // pred_region
      _
    $region37: #{tpu_custom_call.1} parent=1 // pred_fallthru
      _
    // Predicated region
    $region38: #{tpu_custom_call.1} parent=1 // pred_check
      _
    $region39: #{tpu_custom_call.1} parent=1 // pred_check_branch
      %75 = sbr.rel (0) target = $region41
    $region40: #{tpu_custom_call.1} parent=1 // pred_region
      %76 = dma.done [#allocation3], 128
    $region41: #{tpu_custom_call.1} parent=1 // pred_fallthru
      _
    // Predicated region
    $region42: #{tpu_custom_call.1} parent=1 // pred_check
      _
    $region43: #{tpu_custom_call.1} parent=1 // pred_check_branch
      %78 = sbr.rel (0) target = $region45
    $region44: #{tpu_custom_call.1} parent=1 // pred_region
      %79 = dma.done [#allocation6], 3328
    $region45: #{tpu_custom_call.1} parent=1 // pred_fallthru
      _
    // Predicated region
    $region46: #{tpu_custom_call.1} parent=1 // pred_check
      _
    $region47: #{tpu_custom_call.1} parent=1 // pred_check_branch
      %81 = sbr.rel (0) target = $region49
    $region48: #{tpu_custom_call.1} parent=1 // pred_region
      %82 = dma.done [#allocation6], 3328
    $region49: #{tpu_custom_call.1} parent=1 // pred_fallthru
      _
    // Predicated region
    $region50: #{tpu_custom_call.1} parent=1 // pred_check
      _
    $region51: #{tpu_custom_call.1} parent=1 // pred_check_branch
      %84 = sbr.rel (0) target = $region53
    $region52: #{tpu_custom_call.1} parent=1 // pred_region
      %85 = dma.done [#allocation9], 4096
    $region53: #{tpu_custom_call.1} parent=1 // pred_fallthru
      _
    %v86 = vld [vmem:[%s0] sm:$0xff]
    %v87 = vld [vmem:[#allocation5] sm:$0xff]
    %v88 = vld [vmem:[#allocation5 + $0x8] sm:$0xff]
    %v89 = vld [vmem:[#allocation5 + $0x10] sm:$0xff]
    %v90 = vld [vmem:[#allocation5 + $0x18] sm:$0xff]
    %v91 = vld [vmem:[#allocation5 + $0x20] sm:$0xff]
    %v92 = vld [vmem:[#allocation5 + $0x28] sm:$0xff]
    %v93 = vld [vmem:[#allocation5 + $0x30] sm:$0xff]
    %v94 = vld [vmem:[#allocation5 + $0x38] sm:$0xff]
    %v95 = vld [vmem:[#allocation5 + $0x40] sm:$0xff]
    %v96 = vld [vmem:[#allocation5 + $0x48] sm:$0xff]
    %v97 = vld [vmem:[#allocation5 + $0x50] sm:$0xff]
    %v98 = vld [vmem:[#allocation5 + $0x58] sm:$0xff]
    %v99 = vld [vmem:[#allocation5 + $0x60] sm:$0xff]
    %v100 = vld [vmem:[#allocation5 + $0x68] sm:$0xff]
    %v101 = vld [vmem:[#allocation5 + $0x70] sm:$0xff]
    %v102 = vld [vmem:[#allocation5 + $0x78] sm:$0xff]
    %v103 = vld [vmem:[#allocation5 + $0x80] sm:$0xff]
    %v104 = vld [vmem:[#allocation5 + $0x88] sm:$0xff]
    %v105 = vld [vmem:[#allocation5 + $0x90] sm:$0xff]
    %v106 = vld [vmem:[#allocation5 + $0x98] sm:$0xff]
    %v107 = vld [vmem:[#allocation5 + $0xa0] sm:$0xff]
    %v108 = vld [vmem:[#allocation5 + $0xa8] sm:$0xff]
    %v109 = vld [vmem:[#allocation5 + $0xb0] sm:$0xff]
    %v110 = vld [vmem:[#allocation5 + $0xb8] sm:$0xff]
    %v111 = vld [vmem:[#allocation5 + $0xc0] sm:$0xf]
    %v112 = vld [vmem:[#allocation5 + $0xc8] sm:$0xf]
    %v113 = vld [vmem:[#allocation2] sm:$0xff]
    %v114 = vld [vmem:[#allocation7] sm:$0xff]
    %v115 = vld [vmem:[#allocation7 + $0x8] sm:$0xff]
    %v116 = vld [vmem:[#allocation7 + $0x10] sm:$0xff]
    %v117 = vld [vmem:[#allocation7 + $0x18] sm:$0xff]
    %v118 = vld [vmem:[#allocation7 + $0x20] sm:$0xff]
    %v119 = vld [vmem:[#allocation7 + $0x28] sm:$0xff]
    %v120 = vld [vmem:[#allocation7 + $0x30] sm:$0xff]
    %v121 = vld [vmem:[#allocation7 + $0x38] sm:$0xff]
    %v122 = vld [vmem:[#allocation7 + $0x40] sm:$0xff]
    %v123 = vld [vmem:[#allocation7 + $0x48] sm:$0xff]
    %v124 = vld [vmem:[#allocation7 + $0x50] sm:$0xff]
    %v125 = vld [vmem:[#allocation7 + $0x58] sm:$0xff]
    %v126 = vld [vmem:[#allocation7 + $0x60] sm:$0xff]
    %v127 = vld [vmem:[#allocation7 + $0x68] sm:$0xff]
    %v128 = vld [vmem:[#allocation7 + $0x70] sm:$0xff]
    %v129 = vld [vmem:[#allocation7 + $0x78] sm:$0xff]
    %v130 = vld [vmem:[#allocation7 + $0x80] sm:$0xff]
    %v131 = vld [vmem:[#allocation7 + $0x88] sm:$0xff]
    %v132 = vld [vmem:[#allocation7 + $0x90] sm:$0xff]
    %v133 = vld [vmem:[#allocation7 + $0x98] sm:$0xff]
    %v134 = vld [vmem:[#allocation7 + $0xa0] sm:$0xff]
    %v135 = vld [vmem:[#allocation7 + $0xa8] sm:$0xff]
    %v136 = vld [vmem:[#allocation7 + $0xb0] sm:$0xff]
    %v137 = vld [vmem:[#allocation7 + $0xb8] sm:$0xff]
    %v138 = vld [vmem:[#allocation7 + $0xc0] sm:$0xf]
    %v139 = vld [vmem:[#allocation7 + $0xc8] sm:$0xf]
    %vm140 = vcmask 818176
    %v142 = vsel %vm140, %v113, 0
    %vm144 = vcmask 1043456
    %v146 = vsel %vm144, %v138, 0
    %v149 = vsel %vm144, %v139, 0
    %v151 = vand.u32 %v115, 4294901760
    %152 = vmatprep.subr.mxu0 %v151
    %v153 = vand.u32 %v114, 4294901760
    %154 = vmatpush1.msra.mxu0 %v153
    %v155 = vand.u32 %v117, 4294901760
    %156 = vmatprep.subr.mxu0 %v155
    %v157 = vand.u32 %v116, 4294901760
    %158 = vmatpush1.msra.mxu0 %v157
    %v159 = vand.u32 %v119, 4294901760
    %160 = vmatprep.subr.mxu0 %v159
    %v161 = vand.u32 %v118, 4294901760
    %162 = vmatpush1.msra.mxu0 %v161
    %v163 = vand.u32 %v121, 4294901760
    %164 = vmatprep.subr.mxu0 %v163
    %v165 = vand.u32 %v120, 4294901760
    %166 = vmatpush1.msra.mxu0 %v165
    %v167 = vand.u32 %v123, 4294901760
    %168 = vmatprep.subr.mxu0 %v167
    %v169 = vand.u32 %v122, 4294901760
    %170 = vmatpush1.msra.mxu0 %v169
    %v171 = vand.u32 %v125, 4294901760
    %172 = vmatprep.subr.mxu0 %v171
    %v173 = vand.u32 %v124, 4294901760
    %174 = vmatpush1.msra.mxu0 %v173
    %v175 = vand.u32 %v127, 4294901760
    %176 = vmatprep.subr.mxu0 %v175
    %v177 = vand.u32 %v126, 4294901760
    %178 = vmatpush1.msra.mxu0 %v177
    %v179 = vand.u32 %v129, 4294901760
    %180 = vmatprep.subr.mxu0 %v179
    %v181 = vand.u32 %v128, 4294901760
    %182 = vmatpush1.msra.mxu0 %v181
    %v183 = vand.u32 %v131, 4294901760
    %184 = vmatprep.subr.mxu0 %v183
    %v185 = vand.u32 %v130, 4294901760
    %186 = vmatpush1.msra.mxu0 %v185
    %v187 = vand.u32 %v133, 4294901760
    %188 = vmatprep.subr.mxu0 %v187
    %v189 = vand.u32 %v132, 4294901760
    %190 = vmatpush1.msra.mxu0 %v189
    %v191 = vand.u32 %v135, 4294901760
    %192 = vmatprep.subr.mxu0 %v191
    %v193 = vand.u32 %v134, 4294901760
    %194 = vmatpush1.msra.mxu0 %v193
    %v195 = vand.u32 %v137, 4294901760
    %196 = vmatprep.subr.mxu0 %v195
    %v197 = vand.u32 %v136, 4294901760
    %198 = vmatpush1.msra.mxu0 %v197
    %v199 = vand.u32 %v149, 4294901760
    %200 = vmatprep.subr.mxu0 %v199
    %v201 = vand.u32 %v146, 4294901760
    %202 = vmatpush1.msra.mxu0 %v201
    %203 = vmatprep.subr.mxu0 0.0
    %204 = vmatpush1.msra.mxu0 0.0
    %205 = vmatprep.subr.mxu0 0.0
    %206 = vmatpush1.msra.mxu0 0.0
    %207 = vmatprep.subr.mxu0 0.0
    %208 = vmatpush1.msra.mxu0 0.0
    %209 = vmatprep.subr.mxu0 0.0
    %210 = vmatpush1.msra.mxu0 0.0
    %211 = vmatprep.subr.mxu0 0.0
    %212 = vmatpush1.msra.mxu0 0.0
    %213 = vmatprep.subr.mxu0 0.0
    %214 = vmatpush1.msra.mxu0 0.0
    %215 = vmatprep.subr.mxu0 0.0
    %216 = vmatpush1.msra.mxu0 0.0
    %217 = vmatprep.subr.mxu0 0.0
    %218 = vmatpush1.msra.mxu0 0.0
    %219 = vmatprep.subr.mxu0 0.0
    %220 = vmatpush1.msra.mxu0 0.0
    %221 = vmatprep.subr.mxu0 0.0
    %222 = vmatpush1.msra.mxu0 0.0
    %223 = vmatprep.subr.mxu0 0.0
    %224 = vmatpush1.msra.mxu0 0.0
    %225 = vmatprep.subr.mxu0 0.0
    %226 = vmatpush1.msra.mxu0 0.0
    %227 = vmatprep.subr.mxu0 0.0
    %228 = vmatpush1.msra.mxu0 0.0
    %229 = vmatprep.subr.mxu0 0.0
    %230 = vmatpush1.msra.mxu0 0.0
    %231 = vmatprep.subr.mxu0 0.0
    %232 = vmatpush1.msra.mxu0 0.0
    %233 = vmatprep.subr.mxu0 0.0
    %234 = vmatpush1.msra.mxu0 0.0
    %235 = vmatprep.subr.mxu0 0.0
    %236 = vmatpush1.msra.mxu0 0.0
    %237 = vmatprep.subr.mxu0 0.0
    %238 = vmatpush1.msra.mxu0 0.0
    %239 = vmatprep.subr.mxu0 0.0
    %240 = vmatpush1.msra.mxu0 0.0
    %241 = vmatprep.mubr.f32.mxu0 0.0
    %v242 = vand.u32 %v142, 4294901760
    %v243 = vsub.f32 %v142, %v242
    %v244 = vand.u32 %v243, 4294901760
    %v245 = vsub.f32 %v243, %v244
    %v246 = vand.u32 %v245, 4294901760
    %247 = vmatmul.mubr.f32.gmra.mrb[0].mxu0 %v246
    %v248 = vpop.f32.mrb[0].mxu0
    %v249 = vadd.f32 0.0, %v248
    %v250 = vpop.f32.mrb[0].mxu0
    %v251 = vadd.f32 0.0, %v250
    %252 = vdwg.mxu0
    %v253 = vand.u32 %v115, 4294901760
    %v254 = vsub.f32 %v115, %v253
    %v255 = vand.u32 %v254, 4294901760
    %v256 = vsub.f32 %v254, %v255
    %v257 = vand.u32 %v256, 4294901760
    %258 = vmatprep.subr.mxu0 %v257
    %v259 = vand.u32 %v114, 4294901760
    %v260 = vsub.f32 %v114, %v259
    %v261 = vand.u32 %v260, 4294901760
    %v262 = vsub.f32 %v260, %v261
    %v263 = vand.u32 %v262, 4294901760
    %264 = vmatpush1.msra.mxu0 %v263
    %v265 = vand.u32 %v117, 4294901760
    %v266 = vsub.f32 %v117, %v265
    %v267 = vand.u32 %v266, 4294901760
    %v268 = vsub.f32 %v266, %v267
    %v269 = vand.u32 %v268, 4294901760
    %270 = vmatprep.subr.mxu0 %v269
    %v271 = vand.u32 %v116, 4294901760
    %v272 = vsub.f32 %v116, %v271
    %v273 = vand.u32 %v272, 4294901760
    %v274 = vsub.f32 %v272, %v273
    %v275 = vand.u32 %v274, 4294901760
    %276 = vmatpush1.msra.mxu0 %v275
    %v277 = vand.u32 %v119, 4294901760
    %v278 = vsub.f32 %v119, %v277
    %v279 = vand.u32 %v278, 4294901760
    %v280 = vsub.f32 %v278, %v279
    %v281 = vand.u32 %v280, 4294901760
    %282 = vmatprep.subr.mxu0 %v281
    %v283 = vand.u32 %v118, 4294901760
    %v284 = vsub.f32 %v118, %v283
    %v285 = vand.u32 %v284, 4294901760
    %v286 = vsub.f32 %v284, %v285
    %v287 = vand.u32 %v286, 4294901760
    %288 = vmatpush1.msra.mxu0 %v287
    %v289 = vand.u32 %v121, 4294901760
    %v290 = vsub.f32 %v121, %v289
    %v291 = vand.u32 %v290, 4294901760
    %v292 = vsub.f32 %v290, %v291
    %v293 = vand.u32 %v292, 4294901760
    %294 = vmatprep.subr.mxu0 %v293
    %v295 = vand.u32 %v120, 4294901760
    %v296 = vsub.f32 %v120, %v295
    %v297 = vand.u32 %v296, 4294901760
    %v298 = vsub.f32 %v296, %v297
    %v299 = vand.u32 %v298, 4294901760
    %300 = vmatpush1.msra.mxu0 %v299
    %v301 = vand.u32 %v123, 4294901760
    %v302 = vsub.f32 %v123, %v301
    %v303 = vand.u32 %v302, 4294901760
    %v304 = vsub.f32 %v302, %v303
    %v305 = vand.u32 %v304, 4294901760
    %306 = vmatprep.subr.mxu0 %v305
    %v307 = vand.u32 %v122, 4294901760
    %v308 = vsub.f32 %v122, %v307
    %v309 = vand.u32 %v308, 4294901760
    %v310 = vsub.f32 %v308, %v309
    %v311 = vand.u32 %v310, 4294901760
    %312 = vmatpush1.msra.mxu0 %v311
    %v313 = vand.u32 %v125, 4294901760
    %v314 = vsub.f32 %v125, %v313
    %v315 = vand.u32 %v314, 4294901760
    %v316 = vsub.f32 %v314, %v315
    %v317 = vand.u32 %v316, 4294901760
    %318 = vmatprep.subr.mxu0 %v317
    %v319 = vand.u32 %v124, 4294901760
    %v320 = vsub.f32 %v124, %v319
    %v321 = vand.u32 %v320, 4294901760
    %v322 = vsub.f32 %v320, %v321
    %v323 = vand.u32 %v322, 4294901760
    %324 = vmatpush1.msra.mxu0 %v323
    %v325 = vand.u32 %v127, 4294901760
    %v326 = vsub.f32 %v127, %v325
    %v327 = vand.u32 %v326, 4294901760
    %v328 = vsub.f32 %v326, %v327
    %v329 = vand.u32 %v328, 4294901760
    %330 = vmatprep.subr.mxu0 %v329
    %v331 = vand.u32 %v126, 4294901760
    %v332 = vsub.f32 %v126, %v331
    %v333 = vand.u32 %v332, 4294901760
    %v334 = vsub.f32 %v332, %v333
    %v335 = vand.u32 %v334, 4294901760
    %336 = vmatpush1.msra.mxu0 %v335
    %v337 = vand.u32 %v129, 4294901760
    %v338 = vsub.f32 %v129, %v337
    %v339 = vand.u32 %v338, 4294901760
    %v340 = vsub.f32 %v338, %v339
    %v341 = vand.u32 %v340, 4294901760
    %342 = vmatprep.subr.mxu0 %v341
    %v343 = vand.u32 %v128, 4294901760
    %v344 = vsub.f32 %v128, %v343
    %v345 = vand.u32 %v344, 4294901760
    %v346 = vsub.f32 %v344, %v345
    %v347 = vand.u32 %v346, 4294901760
    %348 = vmatpush1.msra.mxu0 %v347
    %v349 = vand.u32 %v131, 4294901760
    %v350 = vsub.f32 %v131, %v349
    %v351 = vand.u32 %v350, 4294901760
    %v352 = vsub.f32 %v350, %v351
    %v353 = vand.u32 %v352, 4294901760
    %354 = vmatprep.subr.mxu0 %v353
    %v355 = vand.u32 %v130, 4294901760
    %v356 = vsub.f32 %v130, %v355
    %v357 = vand.u32 %v356, 4294901760
    %v358 = vsub.f32 %v356, %v357
    %v359 = vand.u32 %v358, 4294901760
    %360 = vmatpush1.msra.mxu0 %v359
    %v361 = vand.u32 %v133, 4294901760
    %v362 = vsub.f32 %v133, %v361
    %v363 = vand.u32 %v362, 4294901760
    %v364 = vsub.f32 %v362, %v363
    %v365 = vand.u32 %v364, 4294901760
    %366 = vmatprep.subr.mxu0 %v365
    %v367 = vand.u32 %v132, 4294901760
    %v368 = vsub.f32 %v132, %v367
    %v369 = vand.u32 %v368, 4294901760
    %v370 = vsub.f32 %v368, %v369
    %v371 = vand.u32 %v370, 4294901760
    %372 = vmatpush1.msra.mxu0 %v371
    %v373 = vand.u32 %v135, 4294901760
    %v374 = vsub.f32 %v135, %v373
    %v375 = vand.u32 %v374, 4294901760
    %v376 = vsub.f32 %v374, %v375
    %v377 = vand.u32 %v376, 4294901760
    %378 = vmatprep.subr.mxu0 %v377
    %v379 = vand.u32 %v134, 4294901760
    %v380 = vsub.f32 %v134, %v379
    %v381 = vand.u32 %v380, 4294901760
    %v382 = vsub.f32 %v380, %v381
    %v383 = vand.u32 %v382, 4294901760
    %384 = vmatpush1.msra.mxu0 %v383
    %v385 = vand.u32 %v137, 4294901760
    %v386 = vsub.f32 %v137, %v385
    %v387 = vand.u32 %v386, 4294901760
    %v388 = vsub.f32 %v386, %v387
    %v389 = vand.u32 %v388, 4294901760
    %390 = vmatprep.subr.mxu0 %v389
    %v391 = vand.u32 %v136, 4294901760
    %v392 = vsub.f32 %v136, %v391
    %v393 = vand.u32 %v392, 4294901760
    %v394 = vsub.f32 %v392, %v393
    %v395 = vand.u32 %v394, 4294901760
    %396 = vmatpush1.msra.mxu0 %v395
    %v397 = vand.u32 %v149, 4294901760
    %v398 = vsub.f32 %v149, %v397
    %v399 = vand.u32 %v398, 4294901760
    %v400 = vsub.f32 %v398, %v399
    %v401 = vand.u32 %v400, 4294901760
    %402 = vmatprep.subr.mxu0 %v401
    %v403 = vand.u32 %v146, 4294901760
    %v404 = vsub.f32 %v146, %v403
    %v405 = vand.u32 %v404, 4294901760
    %v406 = vsub.f32 %v404, %v405
    %v407 = vand.u32 %v406, 4294901760
    %408 = vmatpush1.msra.mxu0 %v407
    %409 = vmatprep.subr.mxu0 0.0
    %410 = vmatpush1.msra.mxu0 0.0
    %411 = vmatprep.subr.mxu0 0.0
    %412 = vmatpush1.msra.mxu0 0.0
    %413 = vmatprep.subr.mxu0 0.0
    %414 = vmatpush1.msra.mxu0 0.0
    %415 = vmatprep.subr.mxu0 0.0
    %416 = vmatpush1.msra.mxu0 0.0
    %417 = vmatprep.subr.mxu0 0.0
    %418 = vmatpush1.msra.mxu0 0.0
    %419 = vmatprep.subr.mxu0 0.0
    %420 = vmatpush1.msra.mxu0 0.0
    %421 = vmatprep.subr.mxu0 0.0
    %422 = vmatpush1.msra.mxu0 0.0
    %423 = vmatprep.subr.mxu0 0.0
    %424 = vmatpush1.msra.mxu0 0.0
    %425 = vmatprep.subr.mxu0 0.0
    %426 = vmatpush1.msra.mxu0 0.0
    %427 = vmatprep.subr.mxu0 0.0
    %428 = vmatpush1.msra.mxu0 0.0
    %429 = vmatprep.subr.mxu0 0.0
    %430 = vmatpush1.msra.mxu0 0.0
    %431 = vmatprep.subr.mxu0 0.0
    %432 = vmatpush1.msra.mxu0 0.0
    %433 = vmatprep.subr.mxu0 0.0
    %434 = vmatpush1.msra.mxu0 0.0
    %435 = vmatprep.subr.mxu0 0.0
    %436 = vmatpush1.msra.mxu0 0.0
    %437 = vmatprep.subr.mxu0 0.0
    %438 = vmatpush1.msra.mxu0 0.0
    %439 = vmatprep.subr.mxu0 0.0
    %440 = vmatpush1.msra.mxu0 0.0
    %441 = vmatprep.subr.mxu0 0.0
    %442 = vmatpush1.msra.mxu0 0.0
    %443 = vmatprep.subr.mxu0 0.0
    %444 = vmatpush1.msra.mxu0 0.0
    %445 = vmatprep.subr.mxu0 0.0
    %446 = vmatpush1.msra.mxu0 0.0
    %447 = vmatprep.mubr.f32.mxu0 0.0
    %v448 = vand.u32 %v142, 4294901760
    %449 = vmatmul.mubr.f32.gmra.mrb[0].mxu0 %v448
    %v450 = vpop.f32.mrb[0].mxu0
    %v451 = vadd.f32 %v249, %v450
    %v452 = vpop.f32.mrb[0].mxu0
    %v453 = vadd.f32 %v251, %v452
    %454 = vdwg.mxu0
    %v455 = vand.u32 %v115, 4294901760
    %v456 = vsub.f32 %v115, %v455
    %457 = vmatprep.subr.mxu0 %v456
    %v458 = vand.u32 %v114, 4294901760
    %v459 = vsub.f32 %v114, %v458
    %460 = vmatpush1.msra.mxu0 %v459
    %v461 = vand.u32 %v117, 4294901760
    %v462 = vsub.f32 %v117, %v461
    %463 = vmatprep.subr.mxu0 %v462
    %v464 = vand.u32 %v116, 4294901760
    %v465 = vsub.f32 %v116, %v464
    %466 = vmatpush1.msra.mxu0 %v465
    %v467 = vand.u32 %v119, 4294901760
    %v468 = vsub.f32 %v119, %v467
    %469 = vmatprep.subr.mxu0 %v468
    %v470 = vand.u32 %v118, 4294901760
    %v471 = vsub.f32 %v118, %v470
    %472 = vmatpush1.msra.mxu0 %v471
    %v473 = vand.u32 %v121, 4294901760
    %v474 = vsub.f32 %v121, %v473
    %475 = vmatprep.subr.mxu0 %v474
    %v476 = vand.u32 %v120, 4294901760
    %v477 = vsub.f32 %v120, %v476
    %478 = vmatpush1.msra.mxu0 %v477
    %v479 = vand.u32 %v123, 4294901760
    %v480 = vsub.f32 %v123, %v479
    %481 = vmatprep.subr.mxu0 %v480
    %v482 = vand.u32 %v122, 4294901760
    %v483 = vsub.f32 %v122, %v482
    %484 = vmatpush1.msra.mxu0 %v483
    %v485 = vand.u32 %v125, 4294901760
    %v486 = vsub.f32 %v125, %v485
    %487 = vmatprep.subr.mxu0 %v486
    %v488 = vand.u32 %v124, 4294901760
    %v489 = vsub.f32 %v124, %v488
    %490 = vmatpush1.msra.mxu0 %v489
    %v491 = vand.u32 %v127, 4294901760
    %v492 = vsub.f32 %v127, %v491
    %493 = vmatprep.subr.mxu0 %v492
    %v494 = vand.u32 %v126, 4294901760
    %v495 = vsub.f32 %v126, %v494
    %496 = vmatpush1.msra.mxu0 %v495
    %v497 = vand.u32 %v129, 4294901760
    %v498 = vsub.f32 %v129, %v497
    %499 = vmatprep.subr.mxu0 %v498
    %v500 = vand.u32 %v128, 4294901760
    %v501 = vsub.f32 %v128, %v500
    %502 = vmatpush1.msra.mxu0 %v501
    %v503 = vand.u32 %v131, 4294901760
    %v504 = vsub.f32 %v131, %v503
    %505 = vmatprep.subr.mxu0 %v504
    %v506 = vand.u32 %v130, 4294901760
    %v507 = vsub.f32 %v130, %v506
    %508 = vmatpush1.msra.mxu0 %v507
    %v509 = vand.u32 %v133, 4294901760
    %v510 = vsub.f32 %v133, %v509
    %511 = vmatprep.subr.mxu0 %v510
    %v512 = vand.u32 %v132, 4294901760
    %v513 = vsub.f32 %v132, %v512
    %514 = vmatpush1.msra.mxu0 %v513
    %v515 = vand.u32 %v135, 4294901760
    %v516 = vsub.f32 %v135, %v515
    %517 = vmatprep.subr.mxu0 %v516
    %v518 = vand.u32 %v134, 4294901760
    %v519 = vsub.f32 %v134, %v518
    %520 = vmatpush1.msra.mxu0 %v519
    %v521 = vand.u32 %v137, 4294901760
    %v522 = vsub.f32 %v137, %v521
    %523 = vmatprep.subr.mxu0 %v522
    %v524 = vand.u32 %v136, 4294901760
    %v525 = vsub.f32 %v136, %v524
    %526 = vmatpush1.msra.mxu0 %v525
    %v527 = vand.u32 %v149, 4294901760
    %v528 = vsub.f32 %v149, %v527
    %529 = vmatprep.subr.mxu0 %v528
    %v530 = vand.u32 %v146, 4294901760
    %v531 = vsub.f32 %v146, %v530
    %532 = vmatpush1.msra.mxu0 %v531
    %533 = vmatprep.subr.mxu0 0.0
    %534 = vmatpush1.msra.mxu0 0.0
    %535 = vmatprep.subr.mxu0 0.0
    %536 = vmatpush1.msra.mxu0 0.0
    %537 = vmatprep.subr.mxu0 0.0
    %538 = vmatpush1.msra.mxu0 0.0
    %539 = vmatprep.subr.mxu0 0.0
    %540 = vmatpush1.msra.mxu0 0.0
    %541 = vmatprep.subr.mxu0 0.0
    %542 = vmatpush1.msra.mxu0 0.0
    %543 = vmatprep.subr.mxu0 0.0
    %544 = vmatpush1.msra.mxu0 0.0
    %545 = vmatprep.subr.mxu0 0.0
    %546 = vmatpush1.msra.mxu0 0.0
    %547 = vmatprep.subr.mxu0 0.0
    %548 = vmatpush1.msra.mxu0 0.0
    %549 = vmatprep.subr.mxu0 0.0
    %550 = vmatpush1.msra.mxu0 0.0
    %551 = vmatprep.subr.mxu0 0.0
    %552 = vmatpush1.msra.mxu0 0.0
    %553 = vmatprep.subr.mxu0 0.0
    %554 = vmatpush1.msra.mxu0 0.0
    %555 = vmatprep.subr.mxu0 0.0
    %556 = vmatpush1.msra.mxu0 0.0
    %557 = vmatprep.subr.mxu0 0.0
    %558 = vmatpush1.msra.mxu0 0.0
    %559 = vmatprep.subr.mxu0 0.0
    %560 = vmatpush1.msra.mxu0 0.0
    %561 = vmatprep.subr.mxu0 0.0
    %562 = vmatpush1.msra.mxu0 0.0
    %563 = vmatprep.subr.mxu0 0.0
    %564 = vmatpush1.msra.mxu0 0.0
    %565 = vmatprep.subr.mxu0 0.0
    %566 = vmatpush1.msra.mxu0 0.0
    %567 = vmatprep.subr.mxu0 0.0
    %568 = vmatpush1.msra.mxu0 0.0
    %569 = vmatprep.subr.mxu0 0.0
    %570 = vmatpush1.msra.mxu0 0.0
    %571 = vmatprep.mubr.f32.mxu0 0.0
    %v572 = vand.u32 %v142, 4294901760
    %v573 = vsub.f32 %v142, %v572
    %574 = vmatmul.mubr.f32.gmra.mrb[0].mxu0 %v573
    %v575 = vpop.f32.mrb[0].mxu0
    %v576 = vadd.f32 %v451, %v575
    %v577 = vpop.f32.mrb[0].mxu0
    %v578 = vadd.f32 %v453, %v577
    %579 = vdwg.mxu0
    %v580 = vand.u32 %v115, 4294901760
    %581 = vmatprep.subr.mxu0 %v580
    %v582 = vand.u32 %v114, 4294901760
    %583 = vmatpush1.msra.mxu0 %v582
    %v584 = vand.u32 %v117, 4294901760
    %585 = vmatprep.subr.mxu0 %v584
    %v586 = vand.u32 %v116, 4294901760
    %587 = vmatpush1.msra.mxu0 %v586
    %v588 = vand.u32 %v119, 4294901760
    %589 = vmatprep.subr.mxu0 %v588
    %v590 = vand.u32 %v118, 4294901760
    %591 = vmatpush1.msra.mxu0 %v590
    %v592 = vand.u32 %v121, 4294901760
    %593 = vmatprep.subr.mxu0 %v592
    %v594 = vand.u32 %v120, 4294901760
    %595 = vmatpush1.msra.mxu0 %v594
    %v596 = vand.u32 %v123, 4294901760
    %597 = vmatprep.subr.mxu0 %v596
    %v598 = vand.u32 %v122, 4294901760
    %599 = vmatpush1.msra.mxu0 %v598
    %v600 = vand.u32 %v125, 4294901760
    %601 = vmatprep.subr.mxu0 %v600
    %v602 = vand.u32 %v124, 4294901760
    %603 = vmatpush1.msra.mxu0 %v602
    %v604 = vand.u32 %v127, 4294901760
    %605 = vmatprep.subr.mxu0 %v604
    %v606 = vand.u32 %v126, 4294901760
    %607 = vmatpush1.msra.mxu0 %v606
    %v608 = vand.u32 %v129, 4294901760
    %609 = vmatprep.subr.mxu0 %v608
    %v610 = vand.u32 %v128, 4294901760
    %611 = vmatpush1.msra.mxu0 %v610
    %v612 = vand.u32 %v131, 4294901760
    %613 = vmatprep.subr.mxu0 %v612
    %v614 = vand.u32 %v130, 4294901760
    %615 = vmatpush1.msra.mxu0 %v614
    %v616 = vand.u32 %v133, 4294901760
    %617 = vmatprep.subr.mxu0 %v616
    %v618 = vand.u32 %v132, 4294901760
    %619 = vmatpush1.msra.mxu0 %v618
    %v620 = vand.u32 %v135, 4294901760
    %621 = vmatprep.subr.mxu0 %v620
    %v622 = vand.u32 %v134, 4294901760
    %623 = vmatpush1.msra.mxu0 %v622
    %v624 = vand.u32 %v137, 4294901760
    %625 = vmatprep.subr.mxu0 %v624
    %v626 = vand.u32 %v136, 4294901760
    %627 = vmatpush1.msra.mxu0 %v626
    %v628 = vand.u32 %v149, 4294901760
    %629 = vmatprep.subr.mxu0 %v628
    %v630 = vand.u32 %v146, 4294901760
    %631 = vmatpush1.msra.mxu0 %v630
    %632 = vmatprep.subr.mxu0 0.0
    %633 = vmatpush1.msra.mxu0 0.0
    %634 = vmatprep.subr.mxu0 0.0
    %635 = vmatpush1.msra.mxu0 0.0
    %636 = vmatprep.subr.mxu0 0.0
    %637 = vmatpush1.msra.mxu0 0.0
    %638 = vmatprep.subr.mxu0 0.0
    %639 = vmatpush1.msra.mxu0 0.0
    %640 = vmatprep.subr.mxu0 0.0
    %641 = vmatpush1.msra.mxu0 0.0
    %642 = vmatprep.subr.mxu0 0.0
    %643 = vmatpush1.msra.mxu0 0.0
    %644 = vmatprep.subr.mxu0 0.0
    %645 = vmatpush1.msra.mxu0 0.0
    %646 = vmatprep.subr.mxu0 0.0
    %647 = vmatpush1.msra.mxu0 0.0
    %648 = vmatprep.subr.mxu0 0.0
    %649 = vmatpush1.msra.mxu0 0.0
    %650 = vmatprep.subr.mxu0 0.0
    %651 = vmatpush1.msra.mxu0 0.0
    %652 = vmatprep.subr.mxu0 0.0
    %653 = vmatpush1.msra.mxu0 0.0
    %654 = vmatprep.subr.mxu0 0.0
    %655 = vmatpush1.msra.mxu0 0.0
    %656 = vmatprep.subr.mxu0 0.0
    %657 = vmatpush1.msra.mxu0 0.0
    %658 = vmatprep.subr.mxu0 0.0
    %659 = vmatpush1.msra.mxu0 0.0
    %660 = vmatprep.subr.mxu0 0.0
    %661 = vmatpush1.msra.mxu0 0.0
    %662 = vmatprep.subr.mxu0 0.0
    %663 = vmatpush1.msra.mxu0 0.0
    %664 = vmatprep.subr.mxu0 0.0
    %665 = vmatpush1.msra.mxu0 0.0
    %666 = vmatprep.subr.mxu0 0.0
    %667 = vmatpush1.msra.mxu0 0.0
    %668 = vmatprep.subr.mxu0 0.0
    %669 = vmatpush1.msra.mxu0 0.0
    %670 = vmatprep.mubr.f32.mxu0 0.0
    %v671 = vand.u32 %v142, 4294901760
    %v672 = vsub.f32 %v142, %v671
    %v673 = vand.u32 %v672, 4294901760
    %674 = vmatmul.mubr.f32.gmra.mrb[0].mxu0 %v673
    %v675 = vpop.f32.mrb[0].mxu0
    %v676 = vadd.f32 %v576, %v675
    %v677 = vpop.f32.mrb[0].mxu0
    %v678 = vadd.f32 %v578, %v677
    %679 = vdwg.mxu0
    %v680 = vand.u32 %v115, 4294901760
    %v681 = vsub.f32 %v115, %v680
    %v682 = vand.u32 %v681, 4294901760
    %683 = vmatprep.subr.mxu0 %v682
    %v684 = vand.u32 %v114, 4294901760
    %v685 = vsub.f32 %v114, %v684
    %v686 = vand.u32 %v685, 4294901760
    %687 = vmatpush1.msra.mxu0 %v686
    %v688 = vand.u32 %v117, 4294901760
    %v689 = vsub.f32 %v117, %v688
    %v690 = vand.u32 %v689, 4294901760
    %691 = vmatprep.subr.mxu0 %v690
    %v692 = vand.u32 %v116, 4294901760
    %v693 = vsub.f32 %v116, %v692
    %v694 = vand.u32 %v693, 4294901760
    %695 = vmatpush1.msra.mxu0 %v694
    %v696 = vand.u32 %v119, 4294901760
    %v697 = vsub.f32 %v119, %v696
    %v698 = vand.u32 %v697, 4294901760
    %699 = vmatprep.subr.mxu0 %v698
    %v700 = vand.u32 %v118, 4294901760
    %v701 = vsub.f32 %v118, %v700
    %v702 = vand.u32 %v701, 4294901760
    %703 = vmatpush1.msra.mxu0 %v702
    %v704 = vand.u32 %v121, 4294901760
    %v705 = vsub.f32 %v121, %v704
    %v706 = vand.u32 %v705, 4294901760
    %707 = vmatprep.subr.mxu0 %v706
    %v708 = vand.u32 %v120, 4294901760
    %v709 = vsub.f32 %v120, %v708
    %v710 = vand.u32 %v709, 4294901760
    %711 = vmatpush1.msra.mxu0 %v710
    %v712 = vand.u32 %v123, 4294901760
    %v713 = vsub.f32 %v123, %v712
    %v714 = vand.u32 %v713, 4294901760
    %715 = vmatprep.subr.mxu0 %v714
    %v716 = vand.u32 %v122, 4294901760
    %v717 = vsub.f32 %v122, %v716
    %v718 = vand.u32 %v717, 4294901760
    %719 = vmatpush1.msra.mxu0 %v718
    %v720 = vand.u32 %v125, 4294901760
    %v721 = vsub.f32 %v125, %v720
    %v722 = vand.u32 %v721, 4294901760
    %723 = vmatprep.subr.mxu0 %v722
    %v724 = vand.u32 %v124, 4294901760
    %v725 = vsub.f32 %v124, %v724
    %v726 = vand.u32 %v725, 4294901760
    %727 = vmatpush1.msra.mxu0 %v726
    %v728 = vand.u32 %v127, 4294901760
    %v729 = vsub.f32 %v127, %v728
    %v730 = vand.u32 %v729, 4294901760
    %731 = vmatprep.subr.mxu0 %v730
    %v732 = vand.u32 %v126, 4294901760
    %v733 = vsub.f32 %v126, %v732
    %v734 = vand.u32 %v733, 4294901760
    %735 = vmatpush1.msra.mxu0 %v734
    %v736 = vand.u32 %v129, 4294901760
    %v737 = vsub.f32 %v129, %v736
    %v738 = vand.u32 %v737, 4294901760
    %739 = vmatprep.subr.mxu0 %v738
    %v740 = vand.u32 %v128, 4294901760
    %v741 = vsub.f32 %v128, %v740
    %v742 = vand.u32 %v741, 4294901760
    %743 = vmatpush1.msra.mxu0 %v742
    %v744 = vand.u32 %v131, 4294901760
    %v745 = vsub.f32 %v131, %v744
    %v746 = vand.u32 %v745, 4294901760
    %747 = vmatprep.subr.mxu0 %v746
    %v748 = vand.u32 %v130, 4294901760
    %v749 = vsub.f32 %v130, %v748
    %v750 = vand.u32 %v749, 4294901760
    %751 = vmatpush1.msra.mxu0 %v750
    %v752 = vand.u32 %v133, 4294901760
    %v753 = vsub.f32 %v133, %v752
    %v754 = vand.u32 %v753, 4294901760
    %755 = vmatprep.subr.mxu0 %v754
    %v756 = vand.u32 %v132, 4294901760
    %v757 = vsub.f32 %v132, %v756
    %v758 = vand.u32 %v757, 4294901760
    %759 = vmatpush1.msra.mxu0 %v758
    %v760 = vand.u32 %v135, 4294901760
    %v761 = vsub.f32 %v135, %v760
    %v762 = vand.u32 %v761, 4294901760
    %763 = vmatprep.subr.mxu0 %v762
    %v764 = vand.u32 %v134, 4294901760
    %v765 = vsub.f32 %v134, %v764
    %v766 = vand.u32 %v765, 4294901760
    %767 = vmatpush1.msra.mxu0 %v766
    %v768 = vand.u32 %v137, 4294901760
    %v769 = vsub.f32 %v137, %v768
    %v770 = vand.u32 %v769, 4294901760
    %771 = vmatprep.subr.mxu0 %v770
    %v772 = vand.u32 %v136, 4294901760
    %v773 = vsub.f32 %v136, %v772
    %v774 = vand.u32 %v773, 4294901760
    %775 = vmatpush1.msra.mxu0 %v774
    %v776 = vand.u32 %v149, 4294901760
    %v777 = vsub.f32 %v149, %v776
    %v778 = vand.u32 %v777, 4294901760
    %779 = vmatprep.subr.mxu0 %v778
    %v780 = vand.u32 %v146, 4294901760
    %v781 = vsub.f32 %v146, %v780
    %v782 = vand.u32 %v781, 4294901760
    %783 = vmatpush1.msra.mxu0 %v782
    %784 = vmatprep.subr.mxu0 0.0
    %785 = vmatpush1.msra.mxu0 0.0
    %786 = vmatprep.subr.mxu0 0.0
    %787 = vmatpush1.msra.mxu0 0.0
    %788 = vmatprep.subr.mxu0 0.0
    %789 = vmatpush1.msra.mxu0 0.0
    %790 = vmatprep.subr.mxu0 0.0
    %791 = vmatpush1.msra.mxu0 0.0
    %792 = vmatprep.subr.mxu0 0.0
    %793 = vmatpush1.msra.mxu0 0.0
    %794 = vmatprep.subr.mxu0 0.0
    %795 = vmatpush1.msra.mxu0 0.0
    %796 = vmatprep.subr.mxu0 0.0
    %797 = vmatpush1.msra.mxu0 0.0
    %798 = vmatprep.subr.mxu0 0.0
    %799 = vmatpush1.msra.mxu0 0.0
    %800 = vmatprep.subr.mxu0 0.0
    %801 = vmatpush1.msra.mxu0 0.0
    %802 = vmatprep.subr.mxu0 0.0
    %803 = vmatpush1.msra.mxu0 0.0
    %804 = vmatprep.subr.mxu0 0.0
    %805 = vmatpush1.msra.mxu0 0.0
    %806 = vmatprep.subr.mxu0 0.0
    %807 = vmatpush1.msra.mxu0 0.0
    %808 = vmatprep.subr.mxu0 0.0
    %809 = vmatpush1.msra.mxu0 0.0
    %810 = vmatprep.subr.mxu0 0.0
    %811 = vmatpush1.msra.mxu0 0.0
    %812 = vmatprep.subr.mxu0 0.0
    %813 = vmatpush1.msra.mxu0 0.0
    %814 = vmatprep.subr.mxu0 0.0
    %815 = vmatpush1.msra.mxu0 0.0
    %816 = vmatprep.subr.mxu0 0.0
    %817 = vmatpush1.msra.mxu0 0.0
    %818 = vmatprep.subr.mxu0 0.0
    %819 = vmatpush1.msra.mxu0 0.0
    %820 = vmatprep.subr.mxu0 0.0
    %821 = vmatpush1.msra.mxu0 0.0
    %822 = vmatprep.mubr.f32.mxu0 0.0
    %v823 = vand.u32 %v142, 4294901760
    %824 = vmatmul.mubr.f32.gmra.mrb[0].mxu0 %v823
    %v825 = vpop.f32.mrb[0].mxu0
    %v826 = vadd.f32 %v676, %v825
    %v827 = vpop.f32.mrb[0].mxu0
    %v828 = vadd.f32 %v678, %v827
    %829 = vdwg.mxu0
    %v830 = vand.u32 %v115, 4294901760
    %831 = vmatprep.subr.mxu0 %v830
    %v832 = vand.u32 %v114, 4294901760
    %833 = vmatpush1.msra.mxu0 %v832
    %v834 = vand.u32 %v117, 4294901760
    %835 = vmatprep.subr.mxu0 %v834
    %v836 = vand.u32 %v116, 4294901760
    %837 = vmatpush1.msra.mxu0 %v836
    %v838 = vand.u32 %v119, 4294901760
    %839 = vmatprep.subr.mxu0 %v838
    %v840 = vand.u32 %v118, 4294901760
    %841 = vmatpush1.msra.mxu0 %v840
    %v842 = vand.u32 %v121, 4294901760
    %843 = vmatprep.subr.mxu0 %v842
    %v844 = vand.u32 %v120, 4294901760
    %845 = vmatpush1.msra.mxu0 %v844
    %v846 = vand.u32 %v123, 4294901760
    %847 = vmatprep.subr.mxu0 %v846
    %v848 = vand.u32 %v122, 4294901760
    %849 = vmatpush1.msra.mxu0 %v848
    %v850 = vand.u32 %v125, 4294901760
    %851 = vmatprep.subr.mxu0 %v850
    %v852 = vand.u32 %v124, 4294901760
    %853 = vmatpush1.msra.mxu0 %v852
    %v854 = vand.u32 %v127, 4294901760
    %855 = vmatprep.subr.mxu0 %v854
    %v856 = vand.u32 %v126, 4294901760
    %857 = vmatpush1.msra.mxu0 %v856
    %v858 = vand.u32 %v129, 4294901760
    %859 = vmatprep.subr.mxu0 %v858
    %v860 = vand.u32 %v128, 4294901760
    %861 = vmatpush1.msra.mxu0 %v860
    %v862 = vand.u32 %v131, 4294901760
    %863 = vmatprep.subr.mxu0 %v862
    %v864 = vand.u32 %v130, 4294901760
    %865 = vmatpush1.msra.mxu0 %v864
    %v866 = vand.u32 %v133, 4294901760
    %867 = vmatprep.subr.mxu0 %v866
    %v868 = vand.u32 %v132, 4294901760
    %869 = vmatpush1.msra.mxu0 %v868
    %v870 = vand.u32 %v135, 4294901760
    %871 = vmatprep.subr.mxu0 %v870
    %v872 = vand.u32 %v134, 4294901760
    %873 = vmatpush1.msra.mxu0 %v872
    %v874 = vand.u32 %v137, 4294901760
    %875 = vmatprep.subr.mxu0 %v874
    %v876 = vand.u32 %v136, 4294901760
    %877 = vmatpush1.msra.mxu0 %v876
    %v878 = vand.u32 %v149, 4294901760
    %879 = vmatprep.subr.mxu0 %v878
    %v880 = vand.u32 %v146, 4294901760
    %881 = vmatpush1.msra.mxu0 %v880
    %882 = vmatprep.subr.mxu0 0.0
    %883 = vmatpush1.msra.mxu0 0.0
    %884 = vmatprep.subr.mxu0 0.0
    %885 = vmatpush1.msra.mxu0 0.0
    %886 = vmatprep.subr.mxu0 0.0
    %887 = vmatpush1.msra.mxu0 0.0
    %888 = vmatprep.subr.mxu0 0.0
    %889 = vmatpush1.msra.mxu0 0.0
    %890 = vmatprep.subr.mxu0 0.0
    %891 = vmatpush1.msra.mxu0 0.0
    %892 = vmatprep.subr.mxu0 0.0
    %893 = vmatpush1.msra.mxu0 0.0
    %894 = vmatprep.subr.mxu0 0.0
    %895 = vmatpush1.msra.mxu0 0.0
    %896 = vmatprep.subr.mxu0 0.0
    %897 = vmatpush1.msra.mxu0 0.0
    %898 = vmatprep.subr.mxu0 0.0
    %899 = vmatpush1.msra.mxu0 0.0
    %900 = vmatprep.subr.mxu0 0.0
    %901 = vmatpush1.msra.mxu0 0.0
    %902 = vmatprep.subr.mxu0 0.0
    %903 = vmatpush1.msra.mxu0 0.0
    %904 = vmatprep.subr.mxu0 0.0
    %905 = vmatpush1.msra.mxu0 0.0
    %906 = vmatprep.subr.mxu0 0.0
    %907 = vmatpush1.msra.mxu0 0.0
    %908 = vmatprep.subr.mxu0 0.0
    %909 = vmatpush1.msra.mxu0 0.0
    %910 = vmatprep.subr.mxu0 0.0
    %911 = vmatpush1.msra.mxu0 0.0
    %912 = vmatprep.subr.mxu0 0.0
    %913 = vmatpush1.msra.mxu0 0.0
    %914 = vmatprep.subr.mxu0 0.0
    %915 = vmatpush1.msra.mxu0 0.0
    %916 = vmatprep.subr.mxu0 0.0
    %917 = vmatpush1.msra.mxu0 0.0
    %918 = vmatprep.subr.mxu0 0.0
    %919 = vmatpush1.msra.mxu0 0.0
    %920 = vmatprep.mubr.f32.mxu0 0.0
    %v921 = vand.u32 %v142, 4294901760
    %922 = vmatmul.mubr.f32.gmra.mrb[0].mxu0 %v921
    %v923 = vpop.f32.mrb[0].mxu0
    %v924 = vadd.f32 %v826, %v923
    %v925 = vpop.f32.mrb[0].mxu0
    %v926 = vadd.f32 %v828, %v925
    %927 = vdwg.mxu0
    %v929 = vsel %vm140, %v86, 0
    %v932 = vsel %vm144, %v111, 0
    %v935 = vsel %vm144, %v112, 0
    %v937 = vand.u32 %v88, 4294901760
    %938 = vmatprep.subr.mxu0 %v937
    %v939 = vand.u32 %v87, 4294901760
    %940 = vmatpush1.msra.mxu0 %v939
    %v941 = vand.u32 %v90, 4294901760
    %942 = vmatprep.subr.mxu0 %v941
    %v943 = vand.u32 %v89, 4294901760
    %944 = vmatpush1.msra.mxu0 %v943
    %v945 = vand.u32 %v92, 4294901760
    %946 = vmatprep.subr.mxu0 %v945
    %v947 = vand.u32 %v91, 4294901760
    %948 = vmatpush1.msra.mxu0 %v947
    %v949 = vand.u32 %v94, 4294901760
    %950 = vmatprep.subr.mxu0 %v949
    %v951 = vand.u32 %v93, 4294901760
    %952 = vmatpush1.msra.mxu0 %v951
    %v953 = vand.u32 %v96, 4294901760
    %954 = vmatprep.subr.mxu0 %v953
    %v955 = vand.u32 %v95, 4294901760
    %956 = vmatpush1.msra.mxu0 %v955
    %v957 = vand.u32 %v98, 4294901760
    %958 = vmatprep.subr.mxu0 %v957
    %v959 = vand.u32 %v97, 4294901760
    %960 = vmatpush1.msra.mxu0 %v959
    %v961 = vand.u32 %v100, 4294901760
    %962 = vmatprep.subr.mxu0 %v961
    %v963 = vand.u32 %v99, 4294901760
    %964 = vmatpush1.msra.mxu0 %v963
    %v965 = vand.u32 %v102, 4294901760
    %966 = vmatprep.subr.mxu0 %v965
    %v967 = vand.u32 %v101, 4294901760
    %968 = vmatpush1.msra.mxu0 %v967
    %v969 = vand.u32 %v104, 4294901760
    %970 = vmatprep.subr.mxu0 %v969
    %v971 = vand.u32 %v103, 4294901760
    %972 = vmatpush1.msra.mxu0 %v971
    %v973 = vand.u32 %v106, 4294901760
    %974 = vmatprep.subr.mxu0 %v973
    %v975 = vand.u32 %v105, 4294901760
    %976 = vmatpush1.msra.mxu0 %v975
    %v977 = vand.u32 %v108, 4294901760
    %978 = vmatprep.subr.mxu0 %v977
    %v979 = vand.u32 %v107, 4294901760
    %980 = vmatpush1.msra.mxu0 %v979
    %v981 = vand.u32 %v110, 4294901760
    %982 = vmatprep.subr.mxu0 %v981
    %v983 = vand.u32 %v109, 4294901760
    %984 = vmatpush1.msra.mxu0 %v983
    %v985 = vand.u32 %v935, 4294901760
    %986 = vmatprep.subr.mxu0 %v985
    %v987 = vand.u32 %v932, 4294901760
    %988 = vmatpush1.msra.mxu0 %v987
    %989 = vmatprep.subr.mxu0 0.0
    %990 = vmatpush1.msra.mxu0 0.0
    %991 = vmatprep.subr.mxu0 0.0
    %992 = vmatpush1.msra.mxu0 0.0
    %993 = vmatprep.subr.mxu0 0.0
    %994 = vmatpush1.msra.mxu0 0.0
    %995 = vmatprep.subr.mxu0 0.0
    %996 = vmatpush1.msra.mxu0 0.0
    %997 = vmatprep.subr.mxu0 0.0
    %998 = vmatpush1.msra.mxu0 0.0
    %999 = vmatprep.subr.mxu0 0.0
    %1000 = vmatpush1.msra.mxu0 0.0
    %1001 = vmatprep.subr.mxu0 0.0
    %1002 = vmatpush1.msra.mxu0 0.0
    %1003 = vmatprep.subr.mxu0 0.0
    %1004 = vmatpush1.msra.mxu0 0.0
    %1005 = vmatprep.subr.mxu0 0.0
    %1006 = vmatpush1.msra.mxu0 0.0
    %1007 = vmatprep.subr.mxu0 0.0
    %1008 = vmatpush1.msra.mxu0 0.0
    %1009 = vmatprep.subr.mxu0 0.0
    %1010 = vmatpush1.msra.mxu0 0.0
    %1011 = vmatprep.subr.mxu0 0.0
    %1012 = vmatpush1.msra.mxu0 0.0
    %1013 = vmatprep.subr.mxu0 0.0
    %1014 = vmatpush1.msra.mxu0 0.0
    %1015 = vmatprep.subr.mxu0 0.0
    %1016 = vmatpush1.msra.mxu0 0.0
    %1017 = vmatprep.subr.mxu0 0.0
    %1018 = vmatpush1.msra.mxu0 0.0
    %1019 = vmatprep.subr.mxu0 0.0
    %1020 = vmatpush1.msra.mxu0 0.0
    %1021 = vmatprep.subr.mxu0 0.0
    %1022 = vmatpush1.msra.mxu0 0.0
    %1023 = vmatprep.subr.mxu0 0.0
    %1024 = vmatpush1.msra.mxu0 0.0
    %1025 = vmatprep.subr.mxu0 0.0
    %1026 = vmatpush1.msra.mxu0 0.0
    %1027 = vmatprep.mubr.f32.mxu0 0.0
    %v1028 = vand.u32 %v929, 4294901760
    %v1029 = vsub.f32 %v929, %v1028
    %v1030 = vand.u32 %v1029, 4294901760
    %v1031 = vsub.f32 %v1029, %v1030
    %v1032 = vand.u32 %v1031, 4294901760
    %1033 = vmatmul.mubr.f32.gmra.mrb[0].mxu0 %v1032
    %v1034 = vpop.f32.mrb[0].mxu0
    %v1035 = vadd.f32 %v924, %v1034
    %v1036 = vpop.f32.mrb[0].mxu0
    %v1037 = vadd.f32 %v926, %v1036
    %1038 = vdwg.mxu0
    %v1039 = vand.u32 %v88, 4294901760
    %v1040 = vsub.f32 %v88, %v1039
    %v1041 = vand.u32 %v1040, 4294901760
    %v1042 = vsub.f32 %v1040, %v1041
    %v1043 = vand.u32 %v1042, 4294901760
    %1044 = vmatprep.subr.mxu0 %v1043
    %v1045 = vand.u32 %v87, 4294901760
    %v1046 = vsub.f32 %v87, %v1045
    %v1047 = vand.u32 %v1046, 4294901760
    %v1048 = vsub.f32 %v1046, %v1047
    %v1049 = vand.u32 %v1048, 4294901760
    %1050 = vmatpush1.msra.mxu0 %v1049
    %v1051 = vand.u32 %v90, 4294901760
    %v1052 = vsub.f32 %v90, %v1051
    %v1053 = vand.u32 %v1052, 4294901760
    %v1054 = vsub.f32 %v1052, %v1053
    %v1055 = vand.u32 %v1054, 4294901760
    %1056 = vmatprep.subr.mxu0 %v1055
    %v1057 = vand.u32 %v89, 4294901760
    %v1058 = vsub.f32 %v89, %v1057
    %v1059 = vand.u32 %v1058, 4294901760
    %v1060 = vsub.f32 %v1058, %v1059
    %v1061 = vand.u32 %v1060, 4294901760
    %1062 = vmatpush1.msra.mxu0 %v1061
    %v1063 = vand.u32 %v92, 4294901760
    %v1064 = vsub.f32 %v92, %v1063
    %v1065 = vand.u32 %v1064, 4294901760
    %v1066 = vsub.f32 %v1064, %v1065
    %v1067 = vand.u32 %v1066, 4294901760
    %1068 = vmatprep.subr.mxu0 %v1067
    %v1069 = vand.u32 %v91, 4294901760
    %v1070 = vsub.f32 %v91, %v1069
    %v1071 = vand.u32 %v1070, 4294901760
    %v1072 = vsub.f32 %v1070, %v1071
    %v1073 = vand.u32 %v1072, 4294901760
    %1074 = vmatpush1.msra.mxu0 %v1073
    %v1075 = vand.u32 %v94, 4294901760
    %v1076 = vsub.f32 %v94, %v1075
    %v1077 = vand.u32 %v1076, 4294901760
    %v1078 = vsub.f32 %v1076, %v1077
    %v1079 = vand.u32 %v1078, 4294901760
    %1080 = vmatprep.subr.mxu0 %v1079
    %v1081 = vand.u32 %v93, 4294901760
    %v1082 = vsub.f32 %v93, %v1081
    %v1083 = vand.u32 %v1082, 4294901760
    %v1084 = vsub.f32 %v1082, %v1083
    %v1085 = vand.u32 %v1084, 4294901760
    %1086 = vmatpush1.msra.mxu0 %v1085
    %v1087 = vand.u32 %v96, 4294901760
    %v1088 = vsub.f32 %v96, %v1087
    %v1089 = vand.u32 %v1088, 4294901760
    %v1090 = vsub.f32 %v1088, %v1089
    %v1091 = vand.u32 %v1090, 4294901760
    %1092 = vmatprep.subr.mxu0 %v1091
    %v1093 = vand.u32 %v95, 4294901760
    %v1094 = vsub.f32 %v95, %v1093
    %v1095 = vand.u32 %v1094, 4294901760
    %v1096 = vsub.f32 %v1094, %v1095
    %v1097 = vand.u32 %v1096, 4294901760
    %1098 = vmatpush1.msra.mxu0 %v1097
    %v1099 = vand.u32 %v98, 4294901760
    %v1100 = vsub.f32 %v98, %v1099
    %v1101 = vand.u32 %v1100, 4294901760
    %v1102 = vsub.f32 %v1100, %v1101
    %v1103 = vand.u32 %v1102, 4294901760
    %1104 = vmatprep.subr.mxu0 %v1103
    %v1105 = vand.u32 %v97, 4294901760
    %v1106 = vsub.f32 %v97, %v1105
    %v1107 = vand.u32 %v1106, 4294901760
    %v1108 = vsub.f32 %v1106, %v1107
    %v1109 = vand.u32 %v1108, 4294901760
    %1110 = vmatpush1.msra.mxu0 %v1109
    %v1111 = vand.u32 %v100, 4294901760
    %v1112 = vsub.f32 %v100, %v1111
    %v1113 = vand.u32 %v1112, 4294901760
    %v1114 = vsub.f32 %v1112, %v1113
    %v1115 = vand.u32 %v1114, 4294901760
    %1116 = vmatprep.subr.mxu0 %v1115
    %v1117 = vand.u32 %v99, 4294901760
    %v1118 = vsub.f32 %v99, %v1117
    %v1119 = vand.u32 %v1118, 4294901760
    %v1120 = vsub.f32 %v1118, %v1119
    %v1121 = vand.u32 %v1120, 4294901760
    %1122 = vmatpush1.msra.mxu0 %v1121
    %v1123 = vand.u32 %v102, 4294901760
    %v1124 = vsub.f32 %v102, %v1123
    %v1125 = vand.u32 %v1124, 4294901760
    %v1126 = vsub.f32 %v1124, %v1125
    %v1127 = vand.u32 %v1126, 4294901760
    %1128 = vmatprep.subr.mxu0 %v1127
    %v1129 = vand.u32 %v101, 4294901760
    %v1130 = vsub.f32 %v101, %v1129
    %v1131 = vand.u32 %v1130, 4294901760
    %v1132 = vsub.f32 %v1130, %v1131
    %v1133 = vand.u32 %v1132, 4294901760
    %1134 = vmatpush1.msra.mxu0 %v1133
    %v1135 = vand.u32 %v104, 4294901760
    %v1136 = vsub.f32 %v104, %v1135
    %v1137 = vand.u32 %v1136, 4294901760
    %v1138 = vsub.f32 %v1136, %v1137
    %v1139 = vand.u32 %v1138, 4294901760
    %1140 = vmatprep.subr.mxu0 %v1139
    %v1141 = vand.u32 %v103, 4294901760
    %v1142 = vsub.f32 %v103, %v1141
    %v1143 = vand.u32 %v1142, 4294901760
    %v1144 = vsub.f32 %v1142, %v1143
    %v1145 = vand.u32 %v1144, 4294901760
    %1146 = vmatpush1.msra.mxu0 %v1145
    %v1147 = vand.u32 %v106, 4294901760
    %v1148 = vsub.f32 %v106, %v1147
    %v1149 = vand.u32 %v1148, 4294901760
    %v1150 = vsub.f32 %v1148, %v1149
    %v1151 = vand.u32 %v1150, 4294901760
    %1152 = vmatprep.subr.mxu0 %v1151
    %v1153 = vand.u32 %v105, 4294901760
    %v1154 = vsub.f32 %v105, %v1153
    %v1155 = vand.u32 %v1154, 4294901760
    %v1156 = vsub.f32 %v1154, %v1155
    %v1157 = vand.u32 %v1156, 4294901760
    %1158 = vmatpush1.msra.mxu0 %v1157
    %v1159 = vand.u32 %v108, 4294901760
    %v1160 = vsub.f32 %v108, %v1159
    %v1161 = vand.u32 %v1160, 4294901760
    %v1162 = vsub.f32 %v1160, %v1161
    %v1163 = vand.u32 %v1162, 4294901760
    %1164 = vmatprep.subr.mxu0 %v1163
    %v1165 = vand.u32 %v107, 4294901760
    %v1166 = vsub.f32 %v107, %v1165
    %v1167 = vand.u32 %v1166, 4294901760
    %v1168 = vsub.f32 %v1166, %v1167
    %v1169 = vand.u32 %v1168, 4294901760
    %1170 = vmatpush1.msra.mxu0 %v1169
    %v1171 = vand.u32 %v110, 4294901760
    %v1172 = vsub.f32 %v110, %v1171
    %v1173 = vand.u32 %v1172, 4294901760
    %v1174 = vsub.f32 %v1172, %v1173
    %v1175 = vand.u32 %v1174, 4294901760
    %1176 = vmatprep.subr.mxu0 %v1175
    %v1177 = vand.u32 %v109, 4294901760
    %v1178 = vsub.f32 %v109, %v1177
    %v1179 = vand.u32 %v1178, 4294901760
    %v1180 = vsub.f32 %v1178, %v1179
    %v1181 = vand.u32 %v1180, 4294901760
    %1182 = vmatpush1.msra.mxu0 %v1181
    %v1183 = vand.u32 %v935, 4294901760
    %v1184 = vsub.f32 %v935, %v1183
    %v1185 = vand.u32 %v1184, 4294901760
    %v1186 = vsub.f32 %v1184, %v1185
    %v1187 = vand.u32 %v1186, 4294901760
    %1188 = vmatprep.subr.mxu0 %v1187
    %v1189 = vand.u32 %v932, 4294901760
    %v1190 = vsub.f32 %v932, %v1189
    %v1191 = vand.u32 %v1190, 4294901760
    %v1192 = vsub.f32 %v1190, %v1191
    %v1193 = vand.u32 %v1192, 4294901760
    %1194 = vmatpush1.msra.mxu0 %v1193
    %1195 = vmatprep.subr.mxu0 0.0
    %1196 = vmatpush1.msra.mxu0 0.0
    %1197 = vmatprep.subr.mxu0 0.0
    %1198 = vmatpush1.msra.mxu0 0.0
    %1199 = vmatprep.subr.mxu0 0.0
    %1200 = vmatpush1.msra.mxu0 0.0
    %1201 = vmatprep.subr.mxu0 0.0
    %1202 = vmatpush1.msra.mxu0 0.0
    %1203 = vmatprep.subr.mxu0 0.0
    %1204 = vmatpush1.msra.mxu0 0.0
    %1205 = vmatprep.subr.mxu0 0.0
    %1206 = vmatpush1.msra.mxu0 0.0
    %1207 = vmatprep.subr.mxu0 0.0
    %1208 = vmatpush1.msra.mxu0 0.0
    %1209 = vmatprep.subr.mxu0 0.0
    %1210 = vmatpush1.msra.mxu0 0.0
    %1211 = vmatprep.subr.mxu0 0.0
    %1212 = vmatpush1.msra.mxu0 0.0
    %1213 = vmatprep.subr.mxu0 0.0
    %1214 = vmatpush1.msra.mxu0 0.0
    %1215 = vmatprep.subr.mxu0 0.0
    %1216 = vmatpush1.msra.mxu0 0.0
    %1217 = vmatprep.subr.mxu0 0.0
    %1218 = vmatpush1.msra.mxu0 0.0
    %1219 = vmatprep.subr.mxu0 0.0
    %1220 = vmatpush1.msra.mxu0 0.0
    %1221 = vmatprep.subr.mxu0 0.0
    %1222 = vmatpush1.msra.mxu0 0.0
    %1223 = vmatprep.subr.mxu0 0.0
    %1224 = vmatpush1.msra.mxu0 0.0
    %1225 = vmatprep.subr.mxu0 0.0
    %1226 = vmatpush1.msra.mxu0 0.0
    %1227 = vmatprep.subr.mxu0 0.0
    %1228 = vmatpush1.msra.mxu0 0.0
    %1229 = vmatprep.subr.mxu0 0.0
    %1230 = vmatpush1.msra.mxu0 0.0
    %1231 = vmatprep.subr.mxu0 0.0
    %1232 = vmatpush1.msra.mxu0 0.0
    %1233 = vmatprep.mubr.f32.mxu0 0.0
    %v1234 = vand.u32 %v929, 4294901760
    %1235 = vmatmul.mubr.f32.gmra.mrb[0].mxu0 %v1234
    %v1236 = vpop.f32.mrb[0].mxu0
    %v1237 = vadd.f32 %v1035, %v1236
    %v1238 = vpop.f32.mrb[0].mxu0
    %v1239 = vadd.f32 %v1037, %v1238
    %1240 = vdwg.mxu0
    %v1241 = vand.u32 %v88, 4294901760
    %v1242 = vsub.f32 %v88, %v1241
    %1243 = vmatprep.subr.mxu0 %v1242
    %v1244 = vand.u32 %v87, 4294901760
    %v1245 = vsub.f32 %v87, %v1244
    %1246 = vmatpush1.msra.mxu0 %v1245
    %v1247 = vand.u32 %v90, 4294901760
    %v1248 = vsub.f32 %v90, %v1247
    %1249 = vmatprep.subr.mxu0 %v1248
    %v1250 = vand.u32 %v89, 4294901760
    %v1251 = vsub.f32 %v89, %v1250
    %1252 = vmatpush1.msra.mxu0 %v1251
    %v1253 = vand.u32 %v92, 4294901760
    %v1254 = vsub.f32 %v92, %v1253
    %1255 = vmatprep.subr.mxu0 %v1254
    %v1256 = vand.u32 %v91, 4294901760
    %v1257 = vsub.f32 %v91, %v1256
    %1258 = vmatpush1.msra.mxu0 %v1257
    %v1259 = vand.u32 %v94, 4294901760
    %v1260 = vsub.f32 %v94, %v1259
    %1261 = vmatprep.subr.mxu0 %v1260
    %v1262 = vand.u32 %v93, 4294901760
    %v1263 = vsub.f32 %v93, %v1262
    %1264 = vmatpush1.msra.mxu0 %v1263
    %v1265 = vand.u32 %v96, 4294901760
    %v1266 = vsub.f32 %v96, %v1265
    %1267 = vmatprep.subr.mxu0 %v1266
    %v1268 = vand.u32 %v95, 4294901760
    %v1269 = vsub.f32 %v95, %v1268
    %1270 = vmatpush1.msra.mxu0 %v1269
    %v1271 = vand.u32 %v98, 4294901760
    %v1272 = vsub.f32 %v98, %v1271
    %1273 = vmatprep.subr.mxu0 %v1272
    %v1274 = vand.u32 %v97, 4294901760
    %v1275 = vsub.f32 %v97, %v1274
    %1276 = vmatpush1.msra.mxu0 %v1275
    %v1277 = vand.u32 %v100, 4294901760
    %v1278 = vsub.f32 %v100, %v1277
    %1279 = vmatprep.subr.mxu0 %v1278
    %v1280 = vand.u32 %v99, 4294901760
    %v1281 = vsub.f32 %v99, %v1280
    %1282 = vmatpush1.msra.mxu0 %v1281
    %v1283 = vand.u32 %v102, 4294901760
    %v1284 = vsub.f32 %v102, %v1283
    %1285 = vmatprep.subr.mxu0 %v1284
    %v1286 = vand.u32 %v101, 4294901760
    %v1287 = vsub.f32 %v101, %v1286
    %1288 = vmatpush1.msra.mxu0 %v1287
    %v1289 = vand.u32 %v104, 4294901760
    %v1290 = vsub.f32 %v104, %v1289
    %1291 = vmatprep.subr.mxu0 %v1290
    %v1292 = vand.u32 %v103, 4294901760
    %v1293 = vsub.f32 %v103, %v1292
    %1294 = vmatpush1.msra.mxu0 %v1293
    %v1295 = vand.u32 %v106, 4294901760
    %v1296 = vsub.f32 %v106, %v1295
    %1297 = vmatprep.subr.mxu0 %v1296
    %v1298 = vand.u32 %v105, 4294901760
    %v1299 = vsub.f32 %v105, %v1298
    %1300 = vmatpush1.msra.mxu0 %v1299
    %v1301 = vand.u32 %v108, 4294901760
    %v1302 = vsub.f32 %v108, %v1301
    %1303 = vmatprep.subr.mxu0 %v1302
    %v1304 = vand.u32 %v107, 4294901760
    %v1305 = vsub.f32 %v107, %v1304
    %1306 = vmatpush1.msra.mxu0 %v1305
    %v1307 = vand.u32 %v110, 4294901760
    %v1308 = vsub.f32 %v110, %v1307
    %1309 = vmatprep.subr.mxu0 %v1308
    %v1310 = vand.u32 %v109, 4294901760
    %v1311 = vsub.f32 %v109, %v1310
    %1312 = vmatpush1.msra.mxu0 %v1311
    %v1313 = vand.u32 %v935, 4294901760
    %v1314 = vsub.f32 %v935, %v1313
    %1315 = vmatprep.subr.mxu0 %v1314
    %v1316 = vand.u32 %v932, 4294901760
    %v1317 = vsub.f32 %v932, %v1316
    %1318 = vmatpush1.msra.mxu0 %v1317
    %1319 = vmatprep.subr.mxu0 0.0
    %1320 = vmatpush1.msra.mxu0 0.0
    %1321 = vmatprep.subr.mxu0 0.0
    %1322 = vmatpush1.msra.mxu0 0.0
    %1323 = vmatprep.subr.mxu0 0.0
    %1324 = vmatpush1.msra.mxu0 0.0
    %1325 = vmatprep.subr.mxu0 0.0
    %1326 = vmatpush1.msra.mxu0 0.0
    %1327 = vmatprep.subr.mxu0 0.0
    %1328 = vmatpush1.msra.mxu0 0.0
    %1329 = vmatprep.subr.mxu0 0.0
    %1330 = vmatpush1.msra.mxu0 0.0
    %1331 = vmatprep.subr.mxu0 0.0
    %1332 = vmatpush1.msra.mxu0 0.0
    %1333 = vmatprep.subr.mxu0 0.0
    %1334 = vmatpush1.msra.mxu0 0.0
    %1335 = vmatprep.subr.mxu0 0.0
    %1336 = vmatpush1.msra.mxu0 0.0
    %1337 = vmatprep.subr.mxu0 0.0
    %1338 = vmatpush1.msra.mxu0 0.0
    %1339 = vmatprep.subr.mxu0 0.0
    %1340 = vmatpush1.msra.mxu0 0.0
    %1341 = vmatprep.subr.mxu0 0.0
    %1342 = vmatpush1.msra.mxu0 0.0
    %1343 = vmatprep.subr.mxu0 0.0
    %1344 = vmatpush1.msra.mxu0 0.0
    %1345 = vmatprep.subr.mxu0 0.0
    %1346 = vmatpush1.msra.mxu0 0.0
    %1347 = vmatprep.subr.mxu0 0.0
    %1348 = vmatpush1.msra.mxu0 0.0
    %1349 = vmatprep.subr.mxu0 0.0
    %1350 = vmatpush1.msra.mxu0 0.0
    %1351 = vmatprep.subr.mxu0 0.0
    %1352 = vmatpush1.msra.mxu0 0.0
    %1353 = vmatprep.subr.mxu0 0.0
    %1354 = vmatpush1.msra.mxu0 0.0
    %1355 = vmatprep.subr.mxu0 0.0
    %1356 = vmatpush1.msra.mxu0 0.0
    %1357 = vmatprep.mubr.f32.mxu0 0.0
    %v1358 = vand.u32 %v929, 4294901760
    %v1359 = vsub.f32 %v929, %v1358
    %1360 = vmatmul.mubr.f32.gmra.mrb[0].mxu0 %v1359
    %v1361 = vpop.f32.mrb[0].mxu0
    %v1362 = vadd.f32 %v1237, %v1361
    %v1363 = vpop.f32.mrb[0].mxu0
    %v1364 = vadd.f32 %v1239, %v1363
    %1365 = vdwg.mxu0
    %v1366 = vand.u32 %v88, 4294901760
    %1367 = vmatprep.subr.mxu0 %v1366
    %v1368 = vand.u32 %v87, 4294901760
    %1369 = vmatpush1.msra.mxu0 %v1368
    %v1370 = vand.u32 %v90, 4294901760
    %1371 = vmatprep.subr.mxu0 %v1370
    %v1372 = vand.u32 %v89, 4294901760
    %1373 = vmatpush1.msra.mxu0 %v1372
    %v1374 = vand.u32 %v92, 4294901760
    %1375 = vmatprep.subr.mxu0 %v1374
    %v1376 = vand.u32 %v91, 4294901760
    %1377 = vmatpush1.msra.mxu0 %v1376
    %v1378 = vand.u32 %v94, 4294901760
    %1379 = vmatprep.subr.mxu0 %v1378
    %v1380 = vand.u32 %v93, 4294901760
    %1381 = vmatpush1.msra.mxu0 %v1380
    %v1382 = vand.u32 %v96, 4294901760
    %1383 = vmatprep.subr.mxu0 %v1382
    %v1384 = vand.u32 %v95, 4294901760
    %1385 = vmatpush1.msra.mxu0 %v1384
    %v1386 = vand.u32 %v98, 4294901760
    %1387 = vmatprep.subr.mxu0 %v1386
    %v1388 = vand.u32 %v97, 4294901760
    %1389 = vmatpush1.msra.mxu0 %v1388
    %v1390 = vand.u32 %v100, 4294901760
    %1391 = vmatprep.subr.mxu0 %v1390
    %v1392 = vand.u32 %v99, 4294901760
    %1393 = vmatpush1.msra.mxu0 %v1392
    %v1394 = vand.u32 %v102, 4294901760
    %1395 = vmatprep.subr.mxu0 %v1394
    %v1396 = vand.u32 %v101, 4294901760
    %1397 = vmatpush1.msra.mxu0 %v1396
    %v1398 = vand.u32 %v104, 4294901760
    %1399 = vmatprep.subr.mxu0 %v1398
    %v1400 = vand.u32 %v103, 4294901760
    %1401 = vmatpush1.msra.mxu0 %v1400
    %v1402 = vand.u32 %v106, 4294901760
    %1403 = vmatprep.subr.mxu0 %v1402
    %v1404 = vand.u32 %v105, 4294901760
    %1405 = vmatpush1.msra.mxu0 %v1404
    %v1406 = vand.u32 %v108, 4294901760
    %1407 = vmatprep.subr.mxu0 %v1406
    %v1408 = vand.u32 %v107, 4294901760
    %1409 = vmatpush1.msra.mxu0 %v1408
    %v1410 = vand.u32 %v110, 4294901760
    %1411 = vmatprep.subr.mxu0 %v1410
    %v1412 = vand.u32 %v109, 4294901760
    %1413 = vmatpush1.msra.mxu0 %v1412
    %v1414 = vand.u32 %v935, 4294901760
    %1415 = vmatprep.subr.mxu0 %v1414
    %v1416 = vand.u32 %v932, 4294901760
    %1417 = vmatpush1.msra.mxu0 %v1416
    %1418 = vmatprep.subr.mxu0 0.0
    %1419 = vmatpush1.msra.mxu0 0.0
    %1420 = vmatprep.subr.mxu0 0.0
    %1421 = vmatpush1.msra.mxu0 0.0
    %1422 = vmatprep.subr.mxu0 0.0
    %1423 = vmatpush1.msra.mxu0 0.0
    %1424 = vmatprep.subr.mxu0 0.0
    %1425 = vmatpush1.msra.mxu0 0.0
    %1426 = vmatprep.subr.mxu0 0.0
    %1427 = vmatpush1.msra.mxu0 0.0
    %1428 = vmatprep.subr.mxu0 0.0
    %1429 = vmatpush1.msra.mxu0 0.0
    %1430 = vmatprep.subr.mxu0 0.0
    %1431 = vmatpush1.msra.mxu0 0.0
    %1432 = vmatprep.subr.mxu0 0.0
    %1433 = vmatpush1.msra.mxu0 0.0
    %1434 = vmatprep.subr.mxu0 0.0
    %1435 = vmatpush1.msra.mxu0 0.0
    %1436 = vmatprep.subr.mxu0 0.0
    %1437 = vmatpush1.msra.mxu0 0.0
    %1438 = vmatprep.subr.mxu0 0.0
    %1439 = vmatpush1.msra.mxu0 0.0
    %1440 = vmatprep.subr.mxu0 0.0
    %1441 = vmatpush1.msra.mxu0 0.0
    %1442 = vmatprep.subr.mxu0 0.0
    %1443 = vmatpush1.msra.mxu0 0.0
    %1444 = vmatprep.subr.mxu0 0.0
    %1445 = vmatpush1.msra.mxu0 0.0
    %1446 = vmatprep.subr.mxu0 0.0
    %1447 = vmatpush1.msra.mxu0 0.0
    %1448 = vmatprep.subr.mxu0 0.0
    %1449 = vmatpush1.msra.mxu0 0.0
    %1450 = vmatprep.subr.mxu0 0.0
    %1451 = vmatpush1.msra.mxu0 0.0
    %1452 = vmatprep.subr.mxu0 0.0
    %1453 = vmatpush1.msra.mxu0 0.0
    %1454 = vmatprep.subr.mxu0 0.0
    %1455 = vmatpush1.msra.mxu0 0.0
    %1456 = vmatprep.mubr.f32.mxu0 0.0
    %v1457 = vand.u32 %v929, 4294901760
    %v1458 = vsub.f32 %v929, %v1457
    %v1459 = vand.u32 %v1458, 4294901760
    %1460 = vmatmul.mubr.f32.gmra.mrb[0].mxu0 %v1459
    %v1461 = vpop.f32.mrb[0].mxu0
    %v1462 = vadd.f32 %v1362, %v1461
    %v1463 = vpop.f32.mrb[0].mxu0
    %v1464 = vadd.f32 %v1364, %v1463
    %1465 = vdwg.mxu0
    %v1466 = vand.u32 %v88, 4294901760
    %v1467 = vsub.f32 %v88, %v1466
    %v1468 = vand.u32 %v1467, 4294901760
    %1469 = vmatprep.subr.mxu0 %v1468
    %v1470 = vand.u32 %v87, 4294901760
    %v1471 = vsub.f32 %v87, %v1470
    %v1472 = vand.u32 %v1471, 4294901760
    %1473 = vmatpush1.msra.mxu0 %v1472
    %v1474 = vand.u32 %v90, 4294901760
    %v1475 = vsub.f32 %v90, %v1474
    %v1476 = vand.u32 %v1475, 4294901760
    %1477 = vmatprep.subr.mxu0 %v1476
    %v1478 = vand.u32 %v89, 4294901760
    %v1479 = vsub.f32 %v89, %v1478
    %v1480 = vand.u32 %v1479, 4294901760
    %1481 = vmatpush1.msra.mxu0 %v1480
    %v1482 = vand.u32 %v92, 4294901760
    %v1483 = vsub.f32 %v92, %v1482
    %v1484 = vand.u32 %v1483, 4294901760
    %1485 = vmatprep.subr.mxu0 %v1484
    %v1486 = vand.u32 %v91, 4294901760
    %v1487 = vsub.f32 %v91, %v1486
    %v1488 = vand.u32 %v1487, 4294901760
    %1489 = vmatpush1.msra.mxu0 %v1488
    %v1490 = vand.u32 %v94, 4294901760
    %v1491 = vsub.f32 %v94, %v1490
    %v1492 = vand.u32 %v1491, 4294901760
    %1493 = vmatprep.subr.mxu0 %v1492
    %v1494 = vand.u32 %v93, 4294901760
    %v1495 = vsub.f32 %v93, %v1494
    %v1496 = vand.u32 %v1495, 4294901760
    %1497 = vmatpush1.msra.mxu0 %v1496
    %v1498 = vand.u32 %v96, 4294901760
    %v1499 = vsub.f32 %v96, %v1498
    %v1500 = vand.u32 %v1499, 4294901760
    %1501 = vmatprep.subr.mxu0 %v1500
    %v1502 = vand.u32 %v95, 4294901760
    %v1503 = vsub.f32 %v95, %v1502
    %v1504 = vand.u32 %v1503, 4294901760
    %1505 = vmatpush1.msra.mxu0 %v1504
    %v1506 = vand.u32 %v98, 4294901760
    %v1507 = vsub.f32 %v98, %v1506
    %v1508 = vand.u32 %v1507, 4294901760
    %1509 = vmatprep.subr.mxu0 %v1508
    %v1510 = vand.u32 %v97, 4294901760
    %v1511 = vsub.f32 %v97, %v1510
    %v1512 = vand.u32 %v1511, 4294901760
    %1513 = vmatpush1.msra.mxu0 %v1512
    %v1514 = vand.u32 %v100, 4294901760
    %v1515 = vsub.f32 %v100, %v1514
    %v1516 = vand.u32 %v1515, 4294901760
    %1517 = vmatprep.subr.mxu0 %v1516
    %v1518 = vand.u32 %v99, 4294901760
    %v1519 = vsub.f32 %v99, %v1518
    %v1520 = vand.u32 %v1519, 4294901760
    %1521 = vmatpush1.msra.mxu0 %v1520
    %v1522 = vand.u32 %v102, 4294901760
    %v1523 = vsub.f32 %v102, %v1522
    %v1524 = vand.u32 %v1523, 4294901760
    %1525 = vmatprep.subr.mxu0 %v1524
    %v1526 = vand.u32 %v101, 4294901760
    %v1527 = vsub.f32 %v101, %v1526
    %v1528 = vand.u32 %v1527, 4294901760
    %1529 = vmatpush1.msra.mxu0 %v1528
    %v1530 = vand.u32 %v104, 4294901760
    %v1531 = vsub.f32 %v104, %v1530
    %v1532 = vand.u32 %v1531, 4294901760
    %1533 = vmatprep.subr.mxu0 %v1532
    %v1534 = vand.u32 %v103, 4294901760
    %v1535 = vsub.f32 %v103, %v1534
    %v1536 = vand.u32 %v1535, 4294901760
    %1537 = vmatpush1.msra.mxu0 %v1536
    %v1538 = vand.u32 %v106, 4294901760
    %v1539 = vsub.f32 %v106, %v1538
    %v1540 = vand.u32 %v1539, 4294901760
    %1541 = vmatprep.subr.mxu0 %v1540
    %v1542 = vand.u32 %v105, 4294901760
    %v1543 = vsub.f32 %v105, %v1542
    %v1544 = vand.u32 %v1543, 4294901760
    %1545 = vmatpush1.msra.mxu0 %v1544
    %v1546 = vand.u32 %v108, 4294901760
    %v1547 = vsub.f32 %v108, %v1546
    %v1548 = vand.u32 %v1547, 4294901760
    %1549 = vmatprep.subr.mxu0 %v1548
    %v1550 = vand.u32 %v107, 4294901760
    %v1551 = vsub.f32 %v107, %v1550
    %v1552 = vand.u32 %v1551, 4294901760
    %1553 = vmatpush1.msra.mxu0 %v1552
    %v1554 = vand.u32 %v110, 4294901760
    %v1555 = vsub.f32 %v110, %v1554
    %v1556 = vand.u32 %v1555, 4294901760
    %1557 = vmatprep.subr.mxu0 %v1556
    %v1558 = vand.u32 %v109, 4294901760
    %v1559 = vsub.f32 %v109, %v1558
    %v1560 = vand.u32 %v1559, 4294901760
    %1561 = vmatpush1.msra.mxu0 %v1560
    %v1562 = vand.u32 %v935, 4294901760
    %v1563 = vsub.f32 %v935, %v1562
    %v1564 = vand.u32 %v1563, 4294901760
    %1565 = vmatprep.subr.mxu0 %v1564
    %v1566 = vand.u32 %v932, 4294901760
    %v1567 = vsub.f32 %v932, %v1566
    %v1568 = vand.u32 %v1567, 4294901760
    %1569 = vmatpush1.msra.mxu0 %v1568
    %1570 = vmatprep.subr.mxu0 0.0
    %1571 = vmatpush1.msra.mxu0 0.0
    %1572 = vmatprep.subr.mxu0 0.0
    %1573 = vmatpush1.msra.mxu0 0.0
    %1574 = vmatprep.subr.mxu0 0.0
    %1575 = vmatpush1.msra.mxu0 0.0
    %1576 = vmatprep.subr.mxu0 0.0
    %1577 = vmatpush1.msra.mxu0 0.0
    %1578 = vmatprep.subr.mxu0 0.0
    %1579 = vmatpush1.msra.mxu0 0.0
    %1580 = vmatprep.subr.mxu0 0.0
    %1581 = vmatpush1.msra.mxu0 0.0
    %1582 = vmatprep.subr.mxu0 0.0
    %1583 = vmatpush1.msra.mxu0 0.0
    %1584 = vmatprep.subr.mxu0 0.0
    %1585 = vmatpush1.msra.mxu0 0.0
    %1586 = vmatprep.subr.mxu0 0.0
    %1587 = vmatpush1.msra.mxu0 0.0
    %1588 = vmatprep.subr.mxu0 0.0
    %1589 = vmatpush1.msra.mxu0 0.0
    %1590 = vmatprep.subr.mxu0 0.0
    %1591 = vmatpush1.msra.mxu0 0.0
    %1592 = vmatprep.subr.mxu0 0.0
    %1593 = vmatpush1.msra.mxu0 0.0
    %1594 = vmatprep.subr.mxu0 0.0
    %1595 = vmatpush1.msra.mxu0 0.0
    %1596 = vmatprep.subr.mxu0 0.0
    %1597 = vmatpush1.msra.mxu0 0.0
    %1598 = vmatprep.subr.mxu0 0.0
    %1599 = vmatpush1.msra.mxu0 0.0
    %1600 = vmatprep.subr.mxu0 0.0
    %1601 = vmatpush1.msra.mxu0 0.0
    %1602 = vmatprep.subr.mxu0 0.0
    %1603 = vmatpush1.msra.mxu0 0.0
    %1604 = vmatprep.subr.mxu0 0.0
    %1605 = vmatpush1.msra.mxu0 0.0
    %1606 = vmatprep.subr.mxu0 0.0
    %1607 = vmatpush1.msra.mxu0 0.0
    %1608 = vmatprep.mubr.f32.mxu0 0.0
    %v1609 = vand.u32 %v929, 4294901760
    %1610 = vmatmul.mubr.f32.gmra.mrb[0].mxu0 %v1609
    %v1611 = vpop.f32.mrb[0].mxu0
    %v1612 = vadd.f32 %v1462, %v1611
    %v1613 = vpop.f32.mrb[0].mxu0
    %v1614 = vadd.f32 %v1464, %v1613
    %1615 = vdwg.mxu0
    %v1616 = vand.u32 %v88, 4294901760
    %1617 = vmatprep.subr.mxu0 %v1616
    %v1618 = vand.u32 %v87, 4294901760
    %1619 = vmatpush1.msra.mxu0 %v1618
    %v1620 = vand.u32 %v90, 4294901760
    %1621 = vmatprep.subr.mxu0 %v1620
    %v1622 = vand.u32 %v89, 4294901760
    %1623 = vmatpush1.msra.mxu0 %v1622
    %v1624 = vand.u32 %v92, 4294901760
    %1625 = vmatprep.subr.mxu0 %v1624
    %v1626 = vand.u32 %v91, 4294901760
    %1627 = vmatpush1.msra.mxu0 %v1626
    %v1628 = vand.u32 %v94, 4294901760
    %1629 = vmatprep.subr.mxu0 %v1628
    %v1630 = vand.u32 %v93, 4294901760
    %1631 = vmatpush1.msra.mxu0 %v1630
    %v1632 = vand.u32 %v96, 4294901760
    %1633 = vmatprep.subr.mxu0 %v1632
    %v1634 = vand.u32 %v95, 4294901760
    %1635 = vmatpush1.msra.mxu0 %v1634
    %v1636 = vand.u32 %v98, 4294901760
    %1637 = vmatprep.subr.mxu0 %v1636
    %v1638 = vand.u32 %v97, 4294901760
    %1639 = vmatpush1.msra.mxu0 %v1638
    %v1640 = vand.u32 %v100, 4294901760
    %1641 = vmatprep.subr.mxu0 %v1640
    %v1642 = vand.u32 %v99, 4294901760
    %1643 = vmatpush1.msra.mxu0 %v1642
    %v1644 = vand.u32 %v102, 4294901760
    %1645 = vmatprep.subr.mxu0 %v1644
    %v1646 = vand.u32 %v101, 4294901760
    %1647 = vmatpush1.msra.mxu0 %v1646
    %v1648 = vand.u32 %v104, 4294901760
    %1649 = vmatprep.subr.mxu0 %v1648
    %v1650 = vand.u32 %v103, 4294901760
    %1651 = vmatpush1.msra.mxu0 %v1650
    %v1652 = vand.u32 %v106, 4294901760
    %1653 = vmatprep.subr.mxu0 %v1652
    %v1654 = vand.u32 %v105, 4294901760
    %1655 = vmatpush1.msra.mxu0 %v1654
    %v1656 = vand.u32 %v108, 4294901760
    %1657 = vmatprep.subr.mxu0 %v1656
    %v1658 = vand.u32 %v107, 4294901760
    %1659 = vmatpush1.msra.mxu0 %v1658
    %v1660 = vand.u32 %v110, 4294901760
    %1661 = vmatprep.subr.mxu0 %v1660
    %v1662 = vand.u32 %v109, 4294901760
    %1663 = vmatpush1.msra.mxu0 %v1662
    %v1664 = vand.u32 %v935, 4294901760
    %1665 = vmatprep.subr.mxu0 %v1664
    %v1666 = vand.u32 %v932, 4294901760
    %1667 = vmatpush1.msra.mxu0 %v1666
    %1668 = vmatprep.subr.mxu0 0.0
    %1669 = vmatpush1.msra.mxu0 0.0
    %1670 = vmatprep.subr.mxu0 0.0
    %1671 = vmatpush1.msra.mxu0 0.0
    %1672 = vmatprep.subr.mxu0 0.0
    %1673 = vmatpush1.msra.mxu0 0.0
    %1674 = vmatprep.subr.mxu0 0.0
    %1675 = vmatpush1.msra.mxu0 0.0
    %1676 = vmatprep.subr.mxu0 0.0
    %1677 = vmatpush1.msra.mxu0 0.0
    %1678 = vmatprep.subr.mxu0 0.0
    %1679 = vmatpush1.msra.mxu0 0.0
    %1680 = vmatprep.subr.mxu0 0.0
    %1681 = vmatpush1.msra.mxu0 0.0
    %1682 = vmatprep.subr.mxu0 0.0
    %1683 = vmatpush1.msra.mxu0 0.0
    %1684 = vmatprep.subr.mxu0 0.0
    %1685 = vmatpush1.msra.mxu0 0.0
    %1686 = vmatprep.subr.mxu0 0.0
    %1687 = vmatpush1.msra.mxu0 0.0
    %1688 = vmatprep.subr.mxu0 0.0
    %1689 = vmatpush1.msra.mxu0 0.0
    %1690 = vmatprep.subr.mxu0 0.0
    %1691 = vmatpush1.msra.mxu0 0.0
    %1692 = vmatprep.subr.mxu0 0.0
    %1693 = vmatpush1.msra.mxu0 0.0
    %1694 = vmatprep.subr.mxu0 0.0
    %1695 = vmatpush1.msra.mxu0 0.0
    %1696 = vmatprep.subr.mxu0 0.0
    %1697 = vmatpush1.msra.mxu0 0.0
    %1698 = vmatprep.subr.mxu0 0.0
    %1699 = vmatpush1.msra.mxu0 0.0
    %1700 = vmatprep.subr.mxu0 0.0
    %1701 = vmatpush1.msra.mxu0 0.0
    %1702 = vmatprep.subr.mxu0 0.0
    %1703 = vmatpush1.msra.mxu0 0.0
    %1704 = vmatprep.subr.mxu0 0.0
    %1705 = vmatpush1.msra.mxu0 0.0
    %1706 = vmatprep.mubr.f32.mxu0 0.0
    %v1707 = vand.u32 %v929, 4294901760
    %1708 = vmatmul.mubr.f32.gmra.mrb[0].mxu0 %v1707
    %v1709 = vpop.f32.mrb[0].mxu0
    %v1710 = vadd.f32 %v1612, %v1709
    %v1711 = vpop.f32.mrb[0].mxu0
    %v1712 = vadd.f32 %v1614, %v1711
    %1713 = vdwg.mxu0
    %v1714 = vld [vmem:[%s2] sm:$0xff]
    %v1715 = vld [vmem:[%s5] sm:$0x3]
    %1717 = vset.pattern.permute.xlu0 0
    %1718 = vperm.xlu0 %1717, %v1714
    %v1719 = vpop.permute.xlu0 %1718
    %v1722 = vlaneseq
    %v1723 = vshrl.u32 %v1722, 7
    %v1724 = vsub.s32 0, %v1723
    %v1725 = vrot.slane %v1715, %v1724
    %v1726 = vlaneseq
    %v1727 = vshrl.u32 %v1726, 7
    %v1728 = vsub.s32 1, %v1727
    %v1729 = vrot.slane %v1715, %v1728
    %v1732 = vmul.f32 %v1719, %v1725
    %v1733 = vmul.f32 %v1719, %v1729
    %v1734 = vadd.f32 %v1710, %v1732
    %v1735 = vadd.f32 %v1712, %v1733
    %v1736 = vld [vmem:[%s6] sm:$0x3]
    %v1738 = vlaneseq
    %v1739 = vshrl.u32 %v1738, 7
    %v1740 = vsub.s32 0, %v1739
    %v1741 = vrot.slane %v1736, %v1740
    %v1742 = vlaneseq
    %v1743 = vshrl.u32 %v1742, 7
    %v1744 = vsub.s32 1, %v1743
    %v1745 = vrot.slane %v1736, %v1744
    %v1748 = vadd.f32 %v1734, %v1741
    %v1749 = vadd.f32 %v1735, %v1745
    %v1750 = vmax.f32 %v1748, 0.0
    %v1751 = vmax.f32 %v1749, 0.0
    %v1752 = vld [vmem:[#allocation8] sm:$0xff]
    %v1753 = vld [vmem:[#allocation8 + $0x8] sm:$0xff]
    %v1754 = vld [vmem:[#allocation8 + $0x10] sm:$0xff]
    %v1755 = vld [vmem:[#allocation8 + $0x18] sm:$0xff]
    %v1756 = vld [vmem:[#allocation8 + $0x20] sm:$0xff]
    %v1757 = vld [vmem:[#allocation8 + $0x28] sm:$0xff]
    %v1758 = vld [vmem:[#allocation8 + $0x30] sm:$0xff]
    %v1759 = vld [vmem:[#allocation8 + $0x38] sm:$0xff]
    %v1760 = vld [vmem:[#allocation8 + $0x40] sm:$0xff]
    %v1761 = vld [vmem:[#allocation8 + $0x48] sm:$0xff]
    %v1762 = vld [vmem:[#allocation8 + $0x50] sm:$0xff]
    %v1763 = vld [vmem:[#allocation8 + $0x58] sm:$0xff]
    %v1764 = vld [vmem:[#allocation8 + $0x60] sm:$0xff]
    %v1765 = vld [vmem:[#allocation8 + $0x68] sm:$0xff]
    %v1766 = vld [vmem:[#allocation8 + $0x70] sm:$0xff]
    %v1767 = vld [vmem:[#allocation8 + $0x78] sm:$0xff]
    %v1768 = vld [vmem:[#allocation8 + $0x80] sm:$0xff]
    %v1769 = vld [vmem:[#allocation8 + $0x88] sm:$0xff]
    %v1770 = vld [vmem:[#allocation8 + $0x90] sm:$0xff]
    %v1771 = vld [vmem:[#allocation8 + $0x98] sm:$0xff]
    %v1772 = vld [vmem:[#allocation8 + $0xa0] sm:$0xff]
    %v1773 = vld [vmem:[#allocation8 + $0xa8] sm:$0xff]
    %v1774 = vld [vmem:[#allocation8 + $0xb0] sm:$0xff]
    %v1775 = vld [vmem:[#allocation8 + $0xb8] sm:$0xff]
    %v1776 = vld [vmem:[#allocation8 + $0xc0] sm:$0xff]
    %v1777 = vld [vmem:[#allocation8 + $0xc8] sm:$0xff]
    %v1778 = vld [vmem:[#allocation8 + $0xd0] sm:$0xff]
    %v1779 = vld [vmem:[#allocation8 + $0xd8] sm:$0xff]
    %v1780 = vld [vmem:[#allocation8 + $0xe0] sm:$0xff]
    %v1781 = vld [vmem:[#allocation8 + $0xe8] sm:$0xff]
    %v1782 = vld [vmem:[#allocation8 + $0xf0] sm:$0xff]
    %v1783 = vld [vmem:[#allocation8 + $0xf8] sm:$0xff]
    %v1784 = vld [vmem:[%s8] sm:$0x1]
    %v1786 = vlaneseq
    %v1787 = vshrl.u32 %v1786, 7
    %v1788 = vsub.s32 0, %v1787
    %v1789 = vrot.slane %v1784, %v1788
    %1791 = vmatprep.subr.mxu0 0.0
    %v1792 = vand.u32 %v1752, 4294901760
    %1793 = vmatpush1.msra.mxu0 %v1792
    %1794 = vmatprep.subr.mxu0 0.0
    %v1795 = vand.u32 %v1753, 4294901760
    %1796 = vmatpush1.msra.mxu0 %v1795
    %1797 = vmatprep.subr.mxu0 0.0
    %v1798 = vand.u32 %v1754, 4294901760
    %1799 = vmatpush1.msra.mxu0 %v1798
    %1800 = vmatprep.subr.mxu0 0.0
    %v1801 = vand.u32 %v1755, 4294901760
    %1802 = vmatpush1.msra.mxu0 %v1801
    %1803 = vmatprep.subr.mxu0 0.0
    %v1804 = vand.u32 %v1756, 4294901760
    %1805 = vmatpush1.msra.mxu0 %v1804
    %1806 = vmatprep.subr.mxu0 0.0
    %v1807 = vand.u32 %v1757, 4294901760
    %1808 = vmatpush1.msra.mxu0 %v1807
    %1809 = vmatprep.subr.mxu0 0.0
    %v1810 = vand.u32 %v1758, 4294901760
    %1811 = vmatpush1.msra.mxu0 %v1810
    %1812 = vmatprep.subr.mxu0 0.0
    %v1813 = vand.u32 %v1759, 4294901760
    %1814 = vmatpush1.msra.mxu0 %v1813
    %1815 = vmatprep.subr.mxu0 0.0
    %v1816 = vand.u32 %v1760, 4294901760
    %1817 = vmatpush1.msra.mxu0 %v1816
    %1818 = vmatprep.subr.mxu0 0.0
    %v1819 = vand.u32 %v1761, 4294901760
    %1820 = vmatpush1.msra.mxu0 %v1819
    %1821 = vmatprep.subr.mxu0 0.0
    %v1822 = vand.u32 %v1762, 4294901760
    %1823 = vmatpush1.msra.mxu0 %v1822
    %1824 = vmatprep.subr.mxu0 0.0
    %v1825 = vand.u32 %v1763, 4294901760
    %1826 = vmatpush1.msra.mxu0 %v1825
    %1827 = vmatprep.subr.mxu0 0.0
    %v1828 = vand.u32 %v1764, 4294901760
    %1829 = vmatpush1.msra.mxu0 %v1828
    %1830 = vmatprep.subr.mxu0 0.0
    %v1831 = vand.u32 %v1765, 4294901760
    %1832 = vmatpush1.msra.mxu0 %v1831
    %1833 = vmatprep.subr.mxu0 0.0
    %v1834 = vand.u32 %v1766, 4294901760
    %1835 = vmatpush1.msra.mxu0 %v1834
    %1836 = vmatprep.subr.mxu0 0.0
    %v1837 = vand.u32 %v1767, 4294901760
    %1838 = vmatpush1.msra.mxu0 %v1837
    %1839 = vmatprep.subr.mxu0 0.0
    %v1840 = vand.u32 %v1768, 4294901760
    %1841 = vmatpush1.msra.mxu0 %v1840
    %1842 = vmatprep.subr.mxu0 0.0
    %v1843 = vand.u32 %v1769, 4294901760
    %1844 = vmatpush1.msra.mxu0 %v1843
    %1845 = vmatprep.subr.mxu0 0.0
    %v1846 = vand.u32 %v1770, 4294901760
    %1847 = vmatpush1.msra.mxu0 %v1846
    %1848 = vmatprep.subr.mxu0 0.0
    %v1849 = vand.u32 %v1771, 4294901760
    %1850 = vmatpush1.msra.mxu0 %v1849
    %1851 = vmatprep.subr.mxu0 0.0
    %v1852 = vand.u32 %v1772, 4294901760
    %1853 = vmatpush1.msra.mxu0 %v1852
    %1854 = vmatprep.subr.mxu0 0.0
    %v1855 = vand.u32 %v1773, 4294901760
    %1856 = vmatpush1.msra.mxu0 %v1855
    %1857 = vmatprep.subr.mxu0 0.0
    %v1858 = vand.u32 %v1774, 4294901760
    %1859 = vmatpush1.msra.mxu0 %v1858
    %1860 = vmatprep.subr.mxu0 0.0
    %v1861 = vand.u32 %v1775, 4294901760
    %1862 = vmatpush1.msra.mxu0 %v1861
    %1863 = vmatprep.subr.mxu0 0.0
    %v1864 = vand.u32 %v1776, 4294901760
    %1865 = vmatpush1.msra.mxu0 %v1864
    %1866 = vmatprep.subr.mxu0 0.0
    %v1867 = vand.u32 %v1777, 4294901760
    %1868 = vmatpush1.msra.mxu0 %v1867
    %1869 = vmatprep.subr.mxu0 0.0
    %v1870 = vand.u32 %v1778, 4294901760
    %1871 = vmatpush1.msra.mxu0 %v1870
    %1872 = vmatprep.subr.mxu0 0.0
    %v1873 = vand.u32 %v1779, 4294901760
    %1874 = vmatpush1.msra.mxu0 %v1873
    %1875 = vmatprep.subr.mxu0 0.0
    %v1876 = vand.u32 %v1780, 4294901760
    %1877 = vmatpush1.msra.mxu0 %v1876
    %1878 = vmatprep.subr.mxu0 0.0
    %v1879 = vand.u32 %v1781, 4294901760
    %1880 = vmatpush1.msra.mxu0 %v1879
    %1881 = vmatprep.subr.mxu0 0.0
    %v1882 = vand.u32 %v1782, 4294901760
    %1883 = vmatpush1.msra.mxu0 %v1882
    %1884 = vmatprep.subr.mxu0 0.0
    %v1885 = vand.u32 %v1783, 4294901760
    %1886 = vmatpush1.msra.mxu0 %v1885
    %v1887 = vand.u32 %v1751, 4294901760
    %v1888 = vsub.f32 %v1751, %v1887
    %v1889 = vand.u32 %v1888, 4294901760
    %v1890 = vsub.f32 %v1888, %v1889
    %v1891 = vand.u32 %v1890, 4294901760
    %1892 = vmatprep.mubr.f32.mxu0 %v1891
    %v1893 = vand.u32 %v1750, 4294901760
    %v1894 = vsub.f32 %v1750, %v1893
    %v1895 = vand.u32 %v1894, 4294901760
    %v1896 = vsub.f32 %v1894, %v1895
    %v1897 = vand.u32 %v1896, 4294901760
    %1898 = vmatmul.mubr.f32.gmra.mrb[0].mxu0 %v1897
    %v1899 = vpop.f32.mrb[0].mxu0
    %v1900 = vadd.f32 %v1789, %v1899
    %v1901 = vpop.f32.mrb[0].mxu0
    %1902 = vdwg.mxu0
    %1903 = vmatprep.subr.mxu0 0.0
    %v1904 = vand.u32 %v1752, 4294901760
    %v1905 = vsub.f32 %v1752, %v1904
    %v1906 = vand.u32 %v1905, 4294901760
    %v1907 = vsub.f32 %v1905, %v1906
    %v1908 = vand.u32 %v1907, 4294901760
    %1909 = vmatpush1.msra.mxu0 %v1908
    %1910 = vmatprep.subr.mxu0 0.0
    %v1911 = vand.u32 %v1753, 4294901760
    %v1912 = vsub.f32 %v1753, %v1911
    %v1913 = vand.u32 %v1912, 4294901760
    %v1914 = vsub.f32 %v1912, %v1913
    %v1915 = vand.u32 %v1914, 4294901760
    %1916 = vmatpush1.msra.mxu0 %v1915
    %1917 = vmatprep.subr.mxu0 0.0
    %v1918 = vand.u32 %v1754, 4294901760
    %v1919 = vsub.f32 %v1754, %v1918
    %v1920 = vand.u32 %v1919, 4294901760
    %v1921 = vsub.f32 %v1919, %v1920
    %v1922 = vand.u32 %v1921, 4294901760
    %1923 = vmatpush1.msra.mxu0 %v1922
    %1924 = vmatprep.subr.mxu0 0.0
    %v1925 = vand.u32 %v1755, 4294901760
    %v1926 = vsub.f32 %v1755, %v1925
    %v1927 = vand.u32 %v1926, 4294901760
    %v1928 = vsub.f32 %v1926, %v1927
    %v1929 = vand.u32 %v1928, 4294901760
    %1930 = vmatpush1.msra.mxu0 %v1929
    %1931 = vmatprep.subr.mxu0 0.0
    %v1932 = vand.u32 %v1756, 4294901760
    %v1933 = vsub.f32 %v1756, %v1932
    %v1934 = vand.u32 %v1933, 4294901760
    %v1935 = vsub.f32 %v1933, %v1934
    %v1936 = vand.u32 %v1935, 4294901760
    %1937 = vmatpush1.msra.mxu0 %v1936
    %1938 = vmatprep.subr.mxu0 0.0
    %v1939 = vand.u32 %v1757, 4294901760
    %v1940 = vsub.f32 %v1757, %v1939
    %v1941 = vand.u32 %v1940, 4294901760
    %v1942 = vsub.f32 %v1940, %v1941
    %v1943 = vand.u32 %v1942, 4294901760
    %1944 = vmatpush1.msra.mxu0 %v1943
    %1945 = vmatprep.subr.mxu0 0.0
    %v1946 = vand.u32 %v1758, 4294901760
    %v1947 = vsub.f32 %v1758, %v1946
    %v1948 = vand.u32 %v1947, 4294901760
    %v1949 = vsub.f32 %v1947, %v1948
    %v1950 = vand.u32 %v1949, 4294901760
    %1951 = vmatpush1.msra.mxu0 %v1950
    %1952 = vmatprep.subr.mxu0 0.0
    %v1953 = vand.u32 %v1759, 4294901760
    %v1954 = vsub.f32 %v1759, %v1953
    %v1955 = vand.u32 %v1954, 4294901760
    %v1956 = vsub.f32 %v1954, %v1955
    %v1957 = vand.u32 %v1956, 4294901760
    %1958 = vmatpush1.msra.mxu0 %v1957
    %1959 = vmatprep.subr.mxu0 0.0
    %v1960 = vand.u32 %v1760, 4294901760
    %v1961 = vsub.f32 %v1760, %v1960
    %v1962 = vand.u32 %v1961, 4294901760
    %v1963 = vsub.f32 %v1961, %v1962
    %v1964 = vand.u32 %v1963, 4294901760
    %1965 = vmatpush1.msra.mxu0 %v1964
    %1966 = vmatprep.subr.mxu0 0.0
    %v1967 = vand.u32 %v1761, 4294901760
    %v1968 = vsub.f32 %v1761, %v1967
    %v1969 = vand.u32 %v1968, 4294901760
    %v1970 = vsub.f32 %v1968, %v1969
    %v1971 = vand.u32 %v1970, 4294901760
    %1972 = vmatpush1.msra.mxu0 %v1971
    %1973 = vmatprep.subr.mxu0 0.0
    %v1974 = vand.u32 %v1762, 4294901760
    %v1975 = vsub.f32 %v1762, %v1974
    %v1976 = vand.u32 %v1975, 4294901760
    %v1977 = vsub.f32 %v1975, %v1976
    %v1978 = vand.u32 %v1977, 4294901760
    %1979 = vmatpush1.msra.mxu0 %v1978
    %1980 = vmatprep.subr.mxu0 0.0
    %v1981 = vand.u32 %v1763, 4294901760
    %v1982 = vsub.f32 %v1763, %v1981
    %v1983 = vand.u32 %v1982, 4294901760
    %v1984 = vsub.f32 %v1982, %v1983
    %v1985 = vand.u32 %v1984, 4294901760
    %1986 = vmatpush1.msra.mxu0 %v1985
    %1987 = vmatprep.subr.mxu0 0.0
    %v1988 = vand.u32 %v1764, 4294901760
    %v1989 = vsub.f32 %v1764, %v1988
    %v1990 = vand.u32 %v1989, 4294901760
    %v1991 = vsub.f32 %v1989, %v1990
    %v1992 = vand.u32 %v1991, 4294901760
    %1993 = vmatpush1.msra.mxu0 %v1992
    %1994 = vmatprep.subr.mxu0 0.0
    %v1995 = vand.u32 %v1765, 4294901760
    %v1996 = vsub.f32 %v1765, %v1995
    %v1997 = vand.u32 %v1996, 4294901760
    %v1998 = vsub.f32 %v1996, %v1997
    %v1999 = vand.u32 %v1998, 4294901760
    %2000 = vmatpush1.msra.mxu0 %v1999
    %2001 = vmatprep.subr.mxu0 0.0
    %v2002 = vand.u32 %v1766, 4294901760
    %v2003 = vsub.f32 %v1766, %v2002
    %v2004 = vand.u32 %v2003, 4294901760
    %v2005 = vsub.f32 %v2003, %v2004
    %v2006 = vand.u32 %v2005, 4294901760
    %2007 = vmatpush1.msra.mxu0 %v2006
    %2008 = vmatprep.subr.mxu0 0.0
    %v2009 = vand.u32 %v1767, 4294901760
    %v2010 = vsub.f32 %v1767, %v2009
    %v2011 = vand.u32 %v2010, 4294901760
    %v2012 = vsub.f32 %v2010, %v2011
    %v2013 = vand.u32 %v2012, 4294901760
    %2014 = vmatpush1.msra.mxu0 %v2013
    %2015 = vmatprep.subr.mxu0 0.0
    %v2016 = vand.u32 %v1768, 4294901760
    %v2017 = vsub.f32 %v1768, %v2016
    %v2018 = vand.u32 %v2017, 4294901760
    %v2019 = vsub.f32 %v2017, %v2018
    %v2020 = vand.u32 %v2019, 4294901760
    %2021 = vmatpush1.msra.mxu0 %v2020
    %2022 = vmatprep.subr.mxu0 0.0
    %v2023 = vand.u32 %v1769, 4294901760
    %v2024 = vsub.f32 %v1769, %v2023
    %v2025 = vand.u32 %v2024, 4294901760
    %v2026 = vsub.f32 %v2024, %v2025
    %v2027 = vand.u32 %v2026, 4294901760
    %2028 = vmatpush1.msra.mxu0 %v2027
    %2029 = vmatprep.subr.mxu0 0.0
    %v2030 = vand.u32 %v1770, 4294901760
    %v2031 = vsub.f32 %v1770, %v2030
    %v2032 = vand.u32 %v2031, 4294901760
    %v2033 = vsub.f32 %v2031, %v2032
    %v2034 = vand.u32 %v2033, 4294901760
    %2035 = vmatpush1.msra.mxu0 %v2034
    %2036 = vmatprep.subr.mxu0 0.0
    %v2037 = vand.u32 %v1771, 4294901760
    %v2038 = vsub.f32 %v1771, %v2037
    %v2039 = vand.u32 %v2038, 4294901760
    %v2040 = vsub.f32 %v2038, %v2039
    %v2041 = vand.u32 %v2040, 4294901760
    %2042 = vmatpush1.msra.mxu0 %v2041
    %2043 = vmatprep.subr.mxu0 0.0
    %v2044 = vand.u32 %v1772, 4294901760
    %v2045 = vsub.f32 %v1772, %v2044
    %v2046 = vand.u32 %v2045, 4294901760
    %v2047 = vsub.f32 %v2045, %v2046
    %v2048 = vand.u32 %v2047, 4294901760
    %2049 = vmatpush1.msra.mxu0 %v2048
    %2050 = vmatprep.subr.mxu0 0.0
    %v2051 = vand.u32 %v1773, 4294901760
    %v2052 = vsub.f32 %v1773, %v2051
    %v2053 = vand.u32 %v2052, 4294901760
    %v2054 = vsub.f32 %v2052, %v2053
    %v2055 = vand.u32 %v2054, 4294901760
    %2056 = vmatpush1.msra.mxu0 %v2055
    %2057 = vmatprep.subr.mxu0 0.0
    %v2058 = vand.u32 %v1774, 4294901760
    %v2059 = vsub.f32 %v1774, %v2058
    %v2060 = vand.u32 %v2059, 4294901760
    %v2061 = vsub.f32 %v2059, %v2060
    %v2062 = vand.u32 %v2061, 4294901760
    %2063 = vmatpush1.msra.mxu0 %v2062
    %2064 = vmatprep.subr.mxu0 0.0
    %v2065 = vand.u32 %v1775, 4294901760
    %v2066 = vsub.f32 %v1775, %v2065
    %v2067 = vand.u32 %v2066, 4294901760
    %v2068 = vsub.f32 %v2066, %v2067
    %v2069 = vand.u32 %v2068, 4294901760
    %2070 = vmatpush1.msra.mxu0 %v2069
    %2071 = vmatprep.subr.mxu0 0.0
    %v2072 = vand.u32 %v1776, 4294901760
    %v2073 = vsub.f32 %v1776, %v2072
    %v2074 = vand.u32 %v2073, 4294901760
    %v2075 = vsub.f32 %v2073, %v2074
    %v2076 = vand.u32 %v2075, 4294901760
    %2077 = vmatpush1.msra.mxu0 %v2076
    %2078 = vmatprep.subr.mxu0 0.0
    %v2079 = vand.u32 %v1777, 4294901760
    %v2080 = vsub.f32 %v1777, %v2079
    %v2081 = vand.u32 %v2080, 4294901760
    %v2082 = vsub.f32 %v2080, %v2081
    %v2083 = vand.u32 %v2082, 4294901760
    %2084 = vmatpush1.msra.mxu0 %v2083
    %2085 = vmatprep.subr.mxu0 0.0
    %v2086 = vand.u32 %v1778, 4294901760
    %v2087 = vsub.f32 %v1778, %v2086
    %v2088 = vand.u32 %v2087, 4294901760
    %v2089 = vsub.f32 %v2087, %v2088
    %v2090 = vand.u32 %v2089, 4294901760
    %2091 = vmatpush1.msra.mxu0 %v2090
    %2092 = vmatprep.subr.mxu0 0.0
    %v2093 = vand.u32 %v1779, 4294901760
    %v2094 = vsub.f32 %v1779, %v2093
    %v2095 = vand.u32 %v2094, 4294901760
    %v2096 = vsub.f32 %v2094, %v2095
    %v2097 = vand.u32 %v2096, 4294901760
    %2098 = vmatpush1.msra.mxu0 %v2097
    %2099 = vmatprep.subr.mxu0 0.0
    %v2100 = vand.u32 %v1780, 4294901760
    %v2101 = vsub.f32 %v1780, %v2100
    %v2102 = vand.u32 %v2101, 4294901760
    %v2103 = vsub.f32 %v2101, %v2102
    %v2104 = vand.u32 %v2103, 4294901760
    %2105 = vmatpush1.msra.mxu0 %v2104
    %2106 = vmatprep.subr.mxu0 0.0
    %v2107 = vand.u32 %v1781, 4294901760
    %v2108 = vsub.f32 %v1781, %v2107
    %v2109 = vand.u32 %v2108, 4294901760
    %v2110 = vsub.f32 %v2108, %v2109
    %v2111 = vand.u32 %v2110, 4294901760
    %2112 = vmatpush1.msra.mxu0 %v2111
    %2113 = vmatprep.subr.mxu0 0.0
    %v2114 = vand.u32 %v1782, 4294901760
    %v2115 = vsub.f32 %v1782, %v2114
    %v2116 = vand.u32 %v2115, 4294901760
    %v2117 = vsub.f32 %v2115, %v2116
    %v2118 = vand.u32 %v2117, 4294901760
    %2119 = vmatpush1.msra.mxu0 %v2118
    %2120 = vmatprep.subr.mxu0 0.0
    %v2121 = vand.u32 %v1783, 4294901760
    %v2122 = vsub.f32 %v1783, %v2121
    %v2123 = vand.u32 %v2122, 4294901760
    %v2124 = vsub.f32 %v2122, %v2123
    %v2125 = vand.u32 %v2124, 4294901760
    %2126 = vmatpush1.msra.mxu0 %v2125
    %v2127 = vand.u32 %v1751, 4294901760
    %2128 = vmatprep.mubr.f32.mxu0 %v2127
    %v2129 = vand.u32 %v1750, 4294901760
    %2130 = vmatmul.mubr.f32.gmra.mrb[0].mxu0 %v2129
    %v2131 = vpop.f32.mrb[0].mxu0
    %v2132 = vadd.f32 %v1900, %v2131
    %v2133 = vpop.f32.mrb[0].mxu0
    %2134 = vdwg.mxu0
    %2135 = vmatprep.subr.mxu0 0.0
    %v2136 = vand.u32 %v1752, 4294901760
    %v2137 = vsub.f32 %v1752, %v2136
    %2138 = vmatpush1.msra.mxu0 %v2137
    %2139 = vmatprep.subr.mxu0 0.0
    %v2140 = vand.u32 %v1753, 4294901760
    %v2141 = vsub.f32 %v1753, %v2140
    %2142 = vmatpush1.msra.mxu0 %v2141
    %2143 = vmatprep.subr.mxu0 0.0
    %v2144 = vand.u32 %v1754, 4294901760
    %v2145 = vsub.f32 %v1754, %v2144
    %2146 = vmatpush1.msra.mxu0 %v2145
    %2147 = vmatprep.subr.mxu0 0.0
    %v2148 = vand.u32 %v1755, 4294901760
    %v2149 = vsub.f32 %v1755, %v2148
    %2150 = vmatpush1.msra.mxu0 %v2149
    %2151 = vmatprep.subr.mxu0 0.0
    %v2152 = vand.u32 %v1756, 4294901760
    %v2153 = vsub.f32 %v1756, %v2152
    %2154 = vmatpush1.msra.mxu0 %v2153
    %2155 = vmatprep.subr.mxu0 0.0
    %v2156 = vand.u32 %v1757, 4294901760
    %v2157 = vsub.f32 %v1757, %v2156
    %2158 = vmatpush1.msra.mxu0 %v2157
    %2159 = vmatprep.subr.mxu0 0.0
    %v2160 = vand.u32 %v1758, 4294901760
    %v2161 = vsub.f32 %v1758, %v2160
    %2162 = vmatpush1.msra.mxu0 %v2161
    %2163 = vmatprep.subr.mxu0 0.0
    %v2164 = vand.u32 %v1759, 4294901760
    %v2165 = vsub.f32 %v1759, %v2164
    %2166 = vmatpush1.msra.mxu0 %v2165
    %2167 = vmatprep.subr.mxu0 0.0
    %v2168 = vand.u32 %v1760, 4294901760
    %v2169 = vsub.f32 %v1760, %v2168
    %2170 = vmatpush1.msra.mxu0 %v2169
    %2171 = vmatprep.subr.mxu0 0.0
    %v2172 = vand.u32 %v1761, 4294901760
    %v2173 = vsub.f32 %v1761, %v2172
    %2174 = vmatpush1.msra.mxu0 %v2173
    %2175 = vmatprep.subr.mxu0 0.0
    %v2176 = vand.u32 %v1762, 4294901760
    %v2177 = vsub.f32 %v1762, %v2176
    %2178 = vmatpush1.msra.mxu0 %v2177
    %2179 = vmatprep.subr.mxu0 0.0
    %v2180 = vand.u32 %v1763, 4294901760
    %v2181 = vsub.f32 %v1763, %v2180
    %2182 = vmatpush1.msra.mxu0 %v2181
    %2183 = vmatprep.subr.mxu0 0.0
    %v2184 = vand.u32 %v1764, 4294901760
    %v2185 = vsub.f32 %v1764, %v2184
    %2186 = vmatpush1.msra.mxu0 %v2185
    %2187 = vmatprep.subr.mxu0 0.0
    %v2188 = vand.u32 %v1765, 4294901760
    %v2189 = vsub.f32 %v1765, %v2188
    %2190 = vmatpush1.msra.mxu0 %v2189
    %2191 = vmatprep.subr.mxu0 0.0
    %v2192 = vand.u32 %v1766, 4294901760
    %v2193 = vsub.f32 %v1766, %v2192
    %2194 = vmatpush1.msra.mxu0 %v2193
    %2195 = vmatprep.subr.mxu0 0.0
    %v2196 = vand.u32 %v1767, 4294901760
    %v2197 = vsub.f32 %v1767, %v2196
    %2198 = vmatpush1.msra.mxu0 %v2197
    %2199 = vmatprep.subr.mxu0 0.0
    %v2200 = vand.u32 %v1768, 4294901760
    %v2201 = vsub.f32 %v1768, %v2200
    %2202 = vmatpush1.msra.mxu0 %v2201
    %2203 = vmatprep.subr.mxu0 0.0
    %v2204 = vand.u32 %v1769, 4294901760
    %v2205 = vsub.f32 %v1769, %v2204
    %2206 = vmatpush1.msra.mxu0 %v2205
    %2207 = vmatprep.subr.mxu0 0.0
    %v2208 = vand.u32 %v1770, 4294901760
    %v2209 = vsub.f32 %v1770, %v2208
    %2210 = vmatpush1.msra.mxu0 %v2209
    %2211 = vmatprep.subr.mxu0 0.0
    %v2212 = vand.u32 %v1771, 4294901760
    %v2213 = vsub.f32 %v1771, %v2212
    %2214 = vmatpush1.msra.mxu0 %v2213
    %2215 = vmatprep.subr.mxu0 0.0
    %v2216 = vand.u32 %v1772, 4294901760
    %v2217 = vsub.f32 %v1772, %v2216
    %2218 = vmatpush1.msra.mxu0 %v2217
    %2219 = vmatprep.subr.mxu0 0.0
    %v2220 = vand.u32 %v1773, 4294901760
    %v2221 = vsub.f32 %v1773, %v2220
    %2222 = vmatpush1.msra.mxu0 %v2221
    %2223 = vmatprep.subr.mxu0 0.0
    %v2224 = vand.u32 %v1774, 4294901760
    %v2225 = vsub.f32 %v1774, %v2224
    %2226 = vmatpush1.msra.mxu0 %v2225
    %2227 = vmatprep.subr.mxu0 0.0
    %v2228 = vand.u32 %v1775, 4294901760
    %v2229 = vsub.f32 %v1775, %v2228
    %2230 = vmatpush1.msra.mxu0 %v2229
    %2231 = vmatprep.subr.mxu0 0.0
    %v2232 = vand.u32 %v1776, 4294901760
    %v2233 = vsub.f32 %v1776, %v2232
    %2234 = vmatpush1.msra.mxu0 %v2233
    %2235 = vmatprep.subr.mxu0 0.0
    %v2236 = vand.u32 %v1777, 4294901760
    %v2237 = vsub.f32 %v1777, %v2236
    %2238 = vmatpush1.msra.mxu0 %v2237
    %2239 = vmatprep.subr.mxu0 0.0
    %v2240 = vand.u32 %v1778, 4294901760
    %v2241 = vsub.f32 %v1778, %v2240
    %2242 = vmatpush1.msra.mxu0 %v2241
    %2243 = vmatprep.subr.mxu0 0.0
    %v2244 = vand.u32 %v1779, 4294901760
    %v2245 = vsub.f32 %v1779, %v2244
    %2246 = vmatpush1.msra.mxu0 %v2245
    %2247 = vmatprep.subr.mxu0 0.0
    %v2248 = vand.u32 %v1780, 4294901760
    %v2249 = vsub.f32 %v1780, %v2248
    %2250 = vmatpush1.msra.mxu0 %v2249
    %2251 = vmatprep.subr.mxu0 0.0
    %v2252 = vand.u32 %v1781, 4294901760
    %v2253 = vsub.f32 %v1781, %v2252
    %2254 = vmatpush1.msra.mxu0 %v2253
    %2255 = vmatprep.subr.mxu0 0.0
    %v2256 = vand.u32 %v1782, 4294901760
    %v2257 = vsub.f32 %v1782, %v2256
    %2258 = vmatpush1.msra.mxu0 %v2257
    %2259 = vmatprep.subr.mxu0 0.0
    %v2260 = vand.u32 %v1783, 4294901760
    %v2261 = vsub.f32 %v1783, %v2260
    %2262 = vmatpush1.msra.mxu0 %v2261
    %v2263 = vand.u32 %v1751, 4294901760
    %v2264 = vsub.f32 %v1751, %v2263
    %2265 = vmatprep.mubr.f32.mxu0 %v2264
    %v2266 = vand.u32 %v1750, 4294901760
    %v2267 = vsub.f32 %v1750, %v2266
    %2268 = vmatmul.mubr.f32.gmra.mrb[0].mxu0 %v2267
    %v2269 = vpop.f32.mrb[0].mxu0
    %v2270 = vadd.f32 %v2132, %v2269
    %v2271 = vpop.f32.mrb[0].mxu0
    %2272 = vdwg.mxu0
    %2273 = vmatprep.subr.mxu0 0.0
    %v2274 = vand.u32 %v1752, 4294901760
    %2275 = vmatpush1.msra.mxu0 %v2274
    %2276 = vmatprep.subr.mxu0 0.0
    %v2277 = vand.u32 %v1753, 4294901760
    %2278 = vmatpush1.msra.mxu0 %v2277
    %2279 = vmatprep.subr.mxu0 0.0
    %v2280 = vand.u32 %v1754, 4294901760
    %2281 = vmatpush1.msra.mxu0 %v2280
    %2282 = vmatprep.subr.mxu0 0.0
    %v2283 = vand.u32 %v1755, 4294901760
    %2284 = vmatpush1.msra.mxu0 %v2283
    %2285 = vmatprep.subr.mxu0 0.0
    %v2286 = vand.u32 %v1756, 4294901760
    %2287 = vmatpush1.msra.mxu0 %v2286
    %2288 = vmatprep.subr.mxu0 0.0
    %v2289 = vand.u32 %v1757, 4294901760
    %2290 = vmatpush1.msra.mxu0 %v2289
    %2291 = vmatprep.subr.mxu0 0.0
    %v2292 = vand.u32 %v1758, 4294901760
    %2293 = vmatpush1.msra.mxu0 %v2292
    %2294 = vmatprep.subr.mxu0 0.0
    %v2295 = vand.u32 %v1759, 4294901760
    %2296 = vmatpush1.msra.mxu0 %v2295
    %2297 = vmatprep.subr.mxu0 0.0
    %v2298 = vand.u32 %v1760, 4294901760
    %2299 = vmatpush1.msra.mxu0 %v2298
    %2300 = vmatprep.subr.mxu0 0.0
    %v2301 = vand.u32 %v1761, 4294901760
    %2302 = vmatpush1.msra.mxu0 %v2301
    %2303 = vmatprep.subr.mxu0 0.0
    %v2304 = vand.u32 %v1762, 4294901760
    %2305 = vmatpush1.msra.mxu0 %v2304
    %2306 = vmatprep.subr.mxu0 0.0
    %v2307 = vand.u32 %v1763, 4294901760
    %2308 = vmatpush1.msra.mxu0 %v2307
    %2309 = vmatprep.subr.mxu0 0.0
    %v2310 = vand.u32 %v1764, 4294901760
    %2311 = vmatpush1.msra.mxu0 %v2310
    %2312 = vmatprep.subr.mxu0 0.0
    %v2313 = vand.u32 %v1765, 4294901760
    %2314 = vmatpush1.msra.mxu0 %v2313
    %2315 = vmatprep.subr.mxu0 0.0
    %v2316 = vand.u32 %v1766, 4294901760
    %2317 = vmatpush1.msra.mxu0 %v2316
    %2318 = vmatprep.subr.mxu0 0.0
    %v2319 = vand.u32 %v1767, 4294901760
    %2320 = vmatpush1.msra.mxu0 %v2319
    %2321 = vmatprep.subr.mxu0 0.0
    %v2322 = vand.u32 %v1768, 4294901760
    %2323 = vmatpush1.msra.mxu0 %v2322
    %2324 = vmatprep.subr.mxu0 0.0
    %v2325 = vand.u32 %v1769, 4294901760
    %2326 = vmatpush1.msra.mxu0 %v2325
    %2327 = vmatprep.subr.mxu0 0.0
    %v2328 = vand.u32 %v1770, 4294901760
    %2329 = vmatpush1.msra.mxu0 %v2328
    %2330 = vmatprep.subr.mxu0 0.0
    %v2331 = vand.u32 %v1771, 4294901760
    %2332 = vmatpush1.msra.mxu0 %v2331
    %2333 = vmatprep.subr.mxu0 0.0
    %v2334 = vand.u32 %v1772, 4294901760
    %2335 = vmatpush1.msra.mxu0 %v2334
    %2336 = vmatprep.subr.mxu0 0.0
    %v2337 = vand.u32 %v1773, 4294901760
    %2338 = vmatpush1.msra.mxu0 %v2337
    %2339 = vmatprep.subr.mxu0 0.0
    %v2340 = vand.u32 %v1774, 4294901760
    %2341 = vmatpush1.msra.mxu0 %v2340
    %2342 = vmatprep.subr.mxu0 0.0
    %v2343 = vand.u32 %v1775, 4294901760
    %2344 = vmatpush1.msra.mxu0 %v2343
    %2345 = vmatprep.subr.mxu0 0.0
    %v2346 = vand.u32 %v1776, 4294901760
    %2347 = vmatpush1.msra.mxu0 %v2346
    %2348 = vmatprep.subr.mxu0 0.0
    %v2349 = vand.u32 %v1777, 4294901760
    %2350 = vmatpush1.msra.mxu0 %v2349
    %2351 = vmatprep.subr.mxu0 0.0
    %v2352 = vand.u32 %v1778, 4294901760
    %2353 = vmatpush1.msra.mxu0 %v2352
    %2354 = vmatprep.subr.mxu0 0.0
    %v2355 = vand.u32 %v1779, 4294901760
    %2356 = vmatpush1.msra.mxu0 %v2355
    %2357 = vmatprep.subr.mxu0 0.0
    %v2358 = vand.u32 %v1780, 4294901760
    %2359 = vmatpush1.msra.mxu0 %v2358
    %2360 = vmatprep.subr.mxu0 0.0
    %v2361 = vand.u32 %v1781, 4294901760
    %2362 = vmatpush1.msra.mxu0 %v2361
    %2363 = vmatprep.subr.mxu0 0.0
    %v2364 = vand.u32 %v1782, 4294901760
    %2365 = vmatpush1.msra.mxu0 %v2364
    %2366 = vmatprep.subr.mxu0 0.0
    %v2367 = vand.u32 %v1783, 4294901760
    %2368 = vmatpush1.msra.mxu0 %v2367
    %v2369 = vand.u32 %v1751, 4294901760
    %v2370 = vsub.f32 %v1751, %v2369
    %v2371 = vand.u32 %v2370, 4294901760
    %2372 = vmatprep.mubr.f32.mxu0 %v2371
    %v2373 = vand.u32 %v1750, 4294901760
    %v2374 = vsub.f32 %v1750, %v2373
    %v2375 = vand.u32 %v2374, 4294901760
    %2376 = vmatmul.mubr.f32.gmra.mrb[0].mxu0 %v2375
    %v2377 = vpop.f32.mrb[0].mxu0
    %v2378 = vadd.f32 %v2270, %v2377
    %v2379 = vpop.f32.mrb[0].mxu0
    %2380 = vdwg.mxu0
    %2381 = vmatprep.subr.mxu0 0.0
    %v2382 = vand.u32 %v1752, 4294901760
    %v2383 = vsub.f32 %v1752, %v2382
    %v2384 = vand.u32 %v2383, 4294901760
    %2385 = vmatpush1.msra.mxu0 %v2384
    %2386 = vmatprep.subr.mxu0 0.0
    %v2387 = vand.u32 %v1753, 4294901760
    %v2388 = vsub.f32 %v1753, %v2387
    %v2389 = vand.u32 %v2388, 4294901760
    %2390 = vmatpush1.msra.mxu0 %v2389
    %2391 = vmatprep.subr.mxu0 0.0
    %v2392 = vand.u32 %v1754, 4294901760
    %v2393 = vsub.f32 %v1754, %v2392
    %v2394 = vand.u32 %v2393, 4294901760
    %2395 = vmatpush1.msra.mxu0 %v2394
    %2396 = vmatprep.subr.mxu0 0.0
    %v2397 = vand.u32 %v1755, 4294901760
    %v2398 = vsub.f32 %v1755, %v2397
    %v2399 = vand.u32 %v2398, 4294901760
    %2400 = vmatpush1.msra.mxu0 %v2399
    %2401 = vmatprep.subr.mxu0 0.0
    %v2402 = vand.u32 %v1756, 4294901760
    %v2403 = vsub.f32 %v1756, %v2402
    %v2404 = vand.u32 %v2403, 4294901760
    %2405 = vmatpush1.msra.mxu0 %v2404
    %2406 = vmatprep.subr.mxu0 0.0
    %v2407 = vand.u32 %v1757, 4294901760
    %v2408 = vsub.f32 %v1757, %v2407
    %v2409 = vand.u32 %v2408, 4294901760
    %2410 = vmatpush1.msra.mxu0 %v2409
    %2411 = vmatprep.subr.mxu0 0.0
    %v2412 = vand.u32 %v1758, 4294901760
    %v2413 = vsub.f32 %v1758, %v2412
    %v2414 = vand.u32 %v2413, 4294901760
    %2415 = vmatpush1.msra.mxu0 %v2414
    %2416 = vmatprep.subr.mxu0 0.0
    %v2417 = vand.u32 %v1759, 4294901760
    %v2418 = vsub.f32 %v1759, %v2417
    %v2419 = vand.u32 %v2418, 4294901760
    %2420 = vmatpush1.msra.mxu0 %v2419
    %2421 = vmatprep.subr.mxu0 0.0
    %v2422 = vand.u32 %v1760, 4294901760
    %v2423 = vsub.f32 %v1760, %v2422
    %v2424 = vand.u32 %v2423, 4294901760
    %2425 = vmatpush1.msra.mxu0 %v2424
    %2426 = vmatprep.subr.mxu0 0.0
    %v2427 = vand.u32 %v1761, 4294901760
    %v2428 = vsub.f32 %v1761, %v2427
    %v2429 = vand.u32 %v2428, 4294901760
    %2430 = vmatpush1.msra.mxu0 %v2429
    %2431 = vmatprep.subr.mxu0 0.0
    %v2432 = vand.u32 %v1762, 4294901760
    %v2433 = vsub.f32 %v1762, %v2432
    %v2434 = vand.u32 %v2433, 4294901760
    %2435 = vmatpush1.msra.mxu0 %v2434
    %2436 = vmatprep.subr.mxu0 0.0
    %v2437 = vand.u32 %v1763, 4294901760
    %v2438 = vsub.f32 %v1763, %v2437
    %v2439 = vand.u32 %v2438, 4294901760
    %2440 = vmatpush1.msra.mxu0 %v2439
    %2441 = vmatprep.subr.mxu0 0.0
    %v2442 = vand.u32 %v1764, 4294901760
    %v2443 = vsub.f32 %v1764, %v2442
    %v2444 = vand.u32 %v2443, 4294901760
    %2445 = vmatpush1.msra.mxu0 %v2444
    %2446 = vmatprep.subr.mxu0 0.0
    %v2447 = vand.u32 %v1765, 4294901760
    %v2448 = vsub.f32 %v1765, %v2447
    %v2449 = vand.u32 %v2448, 4294901760
    %2450 = vmatpush1.msra.mxu0 %v2449
    %2451 = vmatprep.subr.mxu0 0.0
    %v2452 = vand.u32 %v1766, 4294901760
    %v2453 = vsub.f32 %v1766, %v2452
    %v2454 = vand.u32 %v2453, 4294901760
    %2455 = vmatpush1.msra.mxu0 %v2454
    %2456 = vmatprep.subr.mxu0 0.0
    %v2457 = vand.u32 %v1767, 4294901760
    %v2458 = vsub.f32 %v1767, %v2457
    %v2459 = vand.u32 %v2458, 4294901760
    %2460 = vmatpush1.msra.mxu0 %v2459
    %2461 = vmatprep.subr.mxu0 0.0
    %v2462 = vand.u32 %v1768, 4294901760
    %v2463 = vsub.f32 %v1768, %v2462
    %v2464 = vand.u32 %v2463, 4294901760
    %2465 = vmatpush1.msra.mxu0 %v2464
    %2466 = vmatprep.subr.mxu0 0.0
    %v2467 = vand.u32 %v1769, 4294901760
    %v2468 = vsub.f32 %v1769, %v2467
    %v2469 = vand.u32 %v2468, 4294901760
    %2470 = vmatpush1.msra.mxu0 %v2469
    %2471 = vmatprep.subr.mxu0 0.0
    %v2472 = vand.u32 %v1770, 4294901760
    %v2473 = vsub.f32 %v1770, %v2472
    %v2474 = vand.u32 %v2473, 4294901760
    %2475 = vmatpush1.msra.mxu0 %v2474
    %2476 = vmatprep.subr.mxu0 0.0
    %v2477 = vand.u32 %v1771, 4294901760
    %v2478 = vsub.f32 %v1771, %v2477
    %v2479 = vand.u32 %v2478, 4294901760
    %2480 = vmatpush1.msra.mxu0 %v2479
    %2481 = vmatprep.subr.mxu0 0.0
    %v2482 = vand.u32 %v1772, 4294901760
    %v2483 = vsub.f32 %v1772, %v2482
    %v2484 = vand.u32 %v2483, 4294901760
    %2485 = vmatpush1.msra.mxu0 %v2484
    %2486 = vmatprep.subr.mxu0 0.0
    %v2487 = vand.u32 %v1773, 4294901760
    %v2488 = vsub.f32 %v1773, %v2487
    %v2489 = vand.u32 %v2488, 4294901760
    %2490 = vmatpush1.msra.mxu0 %v2489
    %2491 = vmatprep.subr.mxu0 0.0
    %v2492 = vand.u32 %v1774, 4294901760
    %v2493 = vsub.f32 %v1774, %v2492
    %v2494 = vand.u32 %v2493, 4294901760
    %2495 = vmatpush1.msra.mxu0 %v2494
    %2496 = vmatprep.subr.mxu0 0.0
    %v2497 = vand.u32 %v1775, 4294901760
    %v2498 = vsub.f32 %v1775, %v2497
    %v2499 = vand.u32 %v2498, 4294901760
    %2500 = vmatpush1.msra.mxu0 %v2499
    %2501 = vmatprep.subr.mxu0 0.0
    %v2502 = vand.u32 %v1776, 4294901760
    %v2503 = vsub.f32 %v1776, %v2502
    %v2504 = vand.u32 %v2503, 4294901760
    %2505 = vmatpush1.msra.mxu0 %v2504
    %2506 = vmatprep.subr.mxu0 0.0
    %v2507 = vand.u32 %v1777, 4294901760
    %v2508 = vsub.f32 %v1777, %v2507
    %v2509 = vand.u32 %v2508, 4294901760
    %2510 = vmatpush1.msra.mxu0 %v2509
    %2511 = vmatprep.subr.mxu0 0.0
    %v2512 = vand.u32 %v1778, 4294901760
    %v2513 = vsub.f32 %v1778, %v2512
    %v2514 = vand.u32 %v2513, 4294901760
    %2515 = vmatpush1.msra.mxu0 %v2514
    %2516 = vmatprep.subr.mxu0 0.0
    %v2517 = vand.u32 %v1779, 4294901760
    %v2518 = vsub.f32 %v1779, %v2517
    %v2519 = vand.u32 %v2518, 4294901760
    %2520 = vmatpush1.msra.mxu0 %v2519
    %2521 = vmatprep.subr.mxu0 0.0
    %v2522 = vand.u32 %v1780, 4294901760
    %v2523 = vsub.f32 %v1780, %v2522
    %v2524 = vand.u32 %v2523, 4294901760
    %2525 = vmatpush1.msra.mxu0 %v2524
    %2526 = vmatprep.subr.mxu0 0.0
    %v2527 = vand.u32 %v1781, 4294901760
    %v2528 = vsub.f32 %v1781, %v2527
    %v2529 = vand.u32 %v2528, 4294901760
    %2530 = vmatpush1.msra.mxu0 %v2529
    %2531 = vmatprep.subr.mxu0 0.0
    %v2532 = vand.u32 %v1782, 4294901760
    %v2533 = vsub.f32 %v1782, %v2532
    %v2534 = vand.u32 %v2533, 4294901760
    %2535 = vmatpush1.msra.mxu0 %v2534
    %2536 = vmatprep.subr.mxu0 0.0
    %v2537 = vand.u32 %v1783, 4294901760
    %v2538 = vsub.f32 %v1783, %v2537
    %v2539 = vand.u32 %v2538, 4294901760
    %2540 = vmatpush1.msra.mxu0 %v2539
    %v2541 = vand.u32 %v1751, 4294901760
    %2542 = vmatprep.mubr.f32.mxu0 %v2541
    %v2543 = vand.u32 %v1750, 4294901760
    %2544 = vmatmul.mubr.f32.gmra.mrb[0].mxu0 %v2543
    %v2545 = vpop.f32.mrb[0].mxu0
    %v2546 = vadd.f32 %v2378, %v2545
    %v2547 = vpop.f32.mrb[0].mxu0
    %2548 = vdwg.mxu0
    %2549 = vmatprep.subr.mxu0 0.0
    %v2550 = vand.u32 %v1752, 4294901760
    %2551 = vmatpush1.msra.mxu0 %v2550
    %2552 = vmatprep.subr.mxu0 0.0
    %v2553 = vand.u32 %v1753, 4294901760
    %2554 = vmatpush1.msra.mxu0 %v2553
    %2555 = vmatprep.subr.mxu0 0.0
    %v2556 = vand.u32 %v1754, 4294901760
    %2557 = vmatpush1.msra.mxu0 %v2556
    %2558 = vmatprep.subr.mxu0 0.0
    %v2559 = vand.u32 %v1755, 4294901760
    %2560 = vmatpush1.msra.mxu0 %v2559
    %2561 = vmatprep.subr.mxu0 0.0
    %v2562 = vand.u32 %v1756, 4294901760
    %2563 = vmatpush1.msra.mxu0 %v2562
    %2564 = vmatprep.subr.mxu0 0.0
    %v2565 = vand.u32 %v1757, 4294901760
    %2566 = vmatpush1.msra.mxu0 %v2565
    %2567 = vmatprep.subr.mxu0 0.0
    %v2568 = vand.u32 %v1758, 4294901760
    %2569 = vmatpush1.msra.mxu0 %v2568
    %2570 = vmatprep.subr.mxu0 0.0
    %v2571 = vand.u32 %v1759, 4294901760
    %2572 = vmatpush1.msra.mxu0 %v2571
    %2573 = vmatprep.subr.mxu0 0.0
    %v2574 = vand.u32 %v1760, 4294901760
    %2575 = vmatpush1.msra.mxu0 %v2574
    %2576 = vmatprep.subr.mxu0 0.0
    %v2577 = vand.u32 %v1761, 4294901760
    %2578 = vmatpush1.msra.mxu0 %v2577
    %2579 = vmatprep.subr.mxu0 0.0
    %v2580 = vand.u32 %v1762, 4294901760
    %2581 = vmatpush1.msra.mxu0 %v2580
    %2582 = vmatprep.subr.mxu0 0.0
    %v2583 = vand.u32 %v1763, 4294901760
    %2584 = vmatpush1.msra.mxu0 %v2583
    %2585 = vmatprep.subr.mxu0 0.0
    %v2586 = vand.u32 %v1764, 4294901760
    %2587 = vmatpush1.msra.mxu0 %v2586
    %2588 = vmatprep.subr.mxu0 0.0
    %v2589 = vand.u32 %v1765, 4294901760
    %2590 = vmatpush1.msra.mxu0 %v2589
    %2591 = vmatprep.subr.mxu0 0.0
    %v2592 = vand.u32 %v1766, 4294901760
    %2593 = vmatpush1.msra.mxu0 %v2592
    %2594 = vmatprep.subr.mxu0 0.0
    %v2595 = vand.u32 %v1767, 4294901760
    %2596 = vmatpush1.msra.mxu0 %v2595
    %2597 = vmatprep.subr.mxu0 0.0
    %v2598 = vand.u32 %v1768, 4294901760
    %2599 = vmatpush1.msra.mxu0 %v2598
    %2600 = vmatprep.subr.mxu0 0.0
    %v2601 = vand.u32 %v1769, 4294901760
    %2602 = vmatpush1.msra.mxu0 %v2601
    %2603 = vmatprep.subr.mxu0 0.0
    %v2604 = vand.u32 %v1770, 4294901760
    %2605 = vmatpush1.msra.mxu0 %v2604
    %2606 = vmatprep.subr.mxu0 0.0
    %v2607 = vand.u32 %v1771, 4294901760
    %2608 = vmatpush1.msra.mxu0 %v2607
    %2609 = vmatprep.subr.mxu0 0.0
    %v2610 = vand.u32 %v1772, 4294901760
    %2611 = vmatpush1.msra.mxu0 %v2610
    %2612 = vmatprep.subr.mxu0 0.0
    %v2613 = vand.u32 %v1773, 4294901760
    %2614 = vmatpush1.msra.mxu0 %v2613
    %2615 = vmatprep.subr.mxu0 0.0
    %v2616 = vand.u32 %v1774, 4294901760
    %2617 = vmatpush1.msra.mxu0 %v2616
    %2618 = vmatprep.subr.mxu0 0.0
    %v2619 = vand.u32 %v1775, 4294901760
    %2620 = vmatpush1.msra.mxu0 %v2619
    %2621 = vmatprep.subr.mxu0 0.0
    %v2622 = vand.u32 %v1776, 4294901760
    %2623 = vmatpush1.msra.mxu0 %v2622
    %2624 = vmatprep.subr.mxu0 0.0
    %v2625 = vand.u32 %v1777, 4294901760
    %2626 = vmatpush1.msra.mxu0 %v2625
    %2627 = vmatprep.subr.mxu0 0.0
    %v2628 = vand.u32 %v1778, 4294901760
    %2629 = vmatpush1.msra.mxu0 %v2628
    %2630 = vmatprep.subr.mxu0 0.0
    %v2631 = vand.u32 %v1779, 4294901760
    %2632 = vmatpush1.msra.mxu0 %v2631
    %2633 = vmatprep.subr.mxu0 0.0
    %v2634 = vand.u32 %v1780, 4294901760
    %2635 = vmatpush1.msra.mxu0 %v2634
    %2636 = vmatprep.subr.mxu0 0.0
    %v2637 = vand.u32 %v1781, 4294901760
    %2638 = vmatpush1.msra.mxu0 %v2637
    %2639 = vmatprep.subr.mxu0 0.0
    %v2640 = vand.u32 %v1782, 4294901760
    %2641 = vmatpush1.msra.mxu0 %v2640
    %2642 = vmatprep.subr.mxu0 0.0
    %v2643 = vand.u32 %v1783, 4294901760
    %2644 = vmatpush1.msra.mxu0 %v2643
    %v2645 = vand.u32 %v1751, 4294901760
    %2646 = vmatprep.mubr.f32.mxu0 %v2645
    %v2647 = vand.u32 %v1750, 4294901760
    %2648 = vmatmul.mubr.f32.gmra.mrb[0].mxu0 %v2647
    %v2649 = vpop.f32.mrb[0].mxu0
    %v2650 = vadd.f32 %v2546, %v2649
    %v2651 = vpop.f32.mrb[0].mxu0
    %2652 = vdwg.mxu0
    %2653 = vst [vmem:[#allocation10] sm:$0xff] %v2650
    // Predicated region
    $region54: #{tpu_custom_call.1} parent=1 // pred_check
      _
    $region55: #{tpu_custom_call.1} parent=1 // pred_check_branch
      %2655 = sbr.rel (0) target = $region57
    $region56: #{tpu_custom_call.1} parent=1 // pred_region
      %s2657 = ssub.s32 128, 128
      %2658 = vsyncadd [#allocation4], %s2657
      %s2660 = sshll.u32 [#allocation10], 4
      %s2661 = int_to_ptr.vmem [resolvable:$true] %s2660
      %2663 = dma.vmem_to_hbm [thread:$0]  %s2661, 128, %s9, [#allocation4]
    $region57: #{tpu_custom_call.1} parent=1 // pred_fallthru
      _
    // Predicated region
    $region58: #{tpu_custom_call.1} parent=1 // pred_check
      _
    $region59: #{tpu_custom_call.1} parent=1 // pred_check_branch
      %2665 = sbr.rel (0) target = $region61
    $region60: #{tpu_custom_call.1} parent=1 // pred_region
      %2666 = dma.done [#allocation4], 128
    $region61: #{tpu_custom_call.1} parent=1 // pred_fallthru
      _
    %2667 = vsyncpa [#allocation3], 1
    %2668 = vsyncpa [#allocation6], 1
    %2669 = vsyncpa [#allocation9], 1
    %2670 = vsyncpa [#allocation4], 1

</llo_original>
